<compile_context>
chip_gen: v7x
topology: tpu7x:2x2x1
jax: 0.10.0
libtpu: 0.0.40
codegen_flags: <defaults>
</compile_context>

<pallas_src>
import functools

import numpy as np
import jax
import jax.numpy as jnp
from jax.experimental import pallas as pl
from jax.experimental.pallas import tpu as pltpu


_VMEM_LIMIT = 32 * 1024 * 1024   # safe on v5e/v6e/v7x; working set per step << this


def _round_up(x, m):
    return ((x + m - 1) // m) * m


def _cdiv(a, b):
    return -(-a // b)


def _pick_tiling(m, max_tile):
    """Return (tile, mpad): tile multiple of 128, mpad = n_steps * tile >= m,
    with minimal padding waste for a given per-step lane budget."""
    n_steps = max(1, _cdiv(m, max_tile))
    tile = _round_up(_cdiv(m, n_steps), 128)
    mpad = n_steps * tile
    return int(tile), int(mpad)


# ----------------------------- Pallas kernels -----------------------------

def _decode_kernel(raw_ref, code_ref, pred_ref, *, aw, ah):
    # raw_ref  : (n_ch, T) raw logits (only rows 0..3 are used)
    # code_ref : (1, T) int32 packed cell code = i | (j << 7) | (a << 14)
    # pred_ref : (4, T) decoded (cx, cy, w, h) in grid units
    code = code_ref[...]
    gx = (code & 0x7F).astype(jnp.float32)
    gy = ((code >> 7) & 0x7F).astype(jnp.float32)
    a = code >> 14
    anchor_w = jnp.where(a == 0, aw[0], jnp.where(a == 1, aw[1], aw[2]))
    anchor_h = jnp.where(a == 0, ah[0], jnp.where(a == 1, ah[1], ah[2]))
    pred_ref[0:1, :] = jax.nn.sigmoid(raw_ref[0:1, :]) + gx
    pred_ref[1:2, :] = jax.nn.sigmoid(raw_ref[1:2, :]) + gy
    pred_ref[2:3, :] = jnp.exp(raw_ref[2:3, :]) * anchor_w
    pred_ref[3:4, :] = jnp.exp(raw_ref[3:4, :]) * anchor_h


def _loss_kernel(raw_ref, tgt_ref, msk_ref, loss_ref, acc_ref):
    # raw/tgt : (n_ch, T); msk : (3, T) = [obj_mask, tgt_mask, tgt_scale];
    # loss_ref : SMEM (5,); acc_ref : SMEM (5,)
    step = pl.program_id(0)

    @pl.when(step == 0)
    def _init():
        for k in range(5):
            acc_ref[k] = jnp.float32(0.0)

    raw = raw_ref[...]
    tgt = tgt_ref[...]
    obj = msk_ref[0:1, :]
    tm = msk_ref[1:2, :]
    sc = msk_ref[2:3, :]

    row = jax.lax.broadcasted_iota(jnp.int32, raw.shape, 0)
    is_wh = (row == 2) | (row == 3)

    # Sigmoid recomputed here instead of round-tripping an (n_ch, M) array
    # through HBM between the two kernels.  BCE is only evaluated on sigmoid
    # outputs (always in (0,1)), with torch's log clamp at -100.
    sig = jax.nn.sigmoid(raw)
    log_s = jnp.maximum(jnp.log(sig), -100.0)
    log_1ms = jnp.maximum(jnp.log(1.0 - sig), -100.0)
    bce = -(tgt * log_s + (1.0 - tgt) * log_1ms)

    sq_sig = (sig - tgt) * (sig - tgt)
    wh_sq = (sc * sc) * ((raw - tgt) * (raw - tgt))          # only rows 2,3 are kept
    mask_sel = jnp.where(row == 4, obj, tm)                   # obj on row 4 else tgt
    zero = jnp.zeros_like(bce)

    xy_term = jnp.where(row < 2, tm * (sc * sc) * bce, zero)
    wh_term = jnp.where(is_wh, tm * wh_sq, zero)
    obj_term = jnp.where(row == 4, obj * bce, zero)
    cls_term = jnp.where(row >= 5, tm * bce, zero)
    l2_term = jnp.where(is_wh, tm * wh_sq, mask_sel * sq_sig)

    # accumulate across grid steps; padded lanes carry zero masks -> contribute 0
    acc_ref[0] = acc_ref[0] + jnp.sum(xy_term)                # loss_xy
    acc_ref[1] = acc_ref[1] + 0.5 * jnp.sum(wh_term)          # loss_wh
    acc_ref[2] = acc_ref[2] + jnp.sum(obj_term)               # loss_obj
    acc_ref[3] = acc_ref[3] + jnp.sum(cls_term)               # loss_cls
    acc_ref[4] = acc_ref[4] + jnp.sum(l2_term)                # loss_l2

    @pl.when(step == pl.num_programs(0) - 1)
    def _finalize():
        for k in range(5):
            loss_ref[k] = acc_ref[k]


def _decode_call(raw_p, code, n_ch, mpad, tile, aw, ah):
    grid = (mpad // tile,)
    kernel = functools.partial(_decode_kernel, aw=aw, ah=ah)
    return pl.pallas_call(
        kernel,
        out_shape=jax.ShapeDtypeStruct((4, mpad), jnp.float32),
        grid_spec=pltpu.PrefetchScalarGridSpec(
            num_scalar_prefetch=0,
            grid=grid,
            in_specs=[pl.BlockSpec((n_ch, tile), lambda i: (0, i)),
                      pl.BlockSpec((1, tile), lambda i: (0, i))],
            out_specs=pl.BlockSpec((4, tile), lambda i: (0, i))),
        compiler_params=pltpu.CompilerParams(
            dimension_semantics=("parallel",),
            vmem_limit_bytes=_VMEM_LIMIT),
    )(raw_p, code)


def _loss_call(raw_p, tgt_p, msk_p, n_ch, mpad, tile):
    grid = (mpad // tile,)
    big = pl.BlockSpec((n_ch, tile), lambda i: (0, i))
    mspec = pl.BlockSpec((3, tile), lambda i: (0, i))
    return pl.pallas_call(
        _loss_kernel,
        out_shape=jax.ShapeDtypeStruct((5,), jnp.float32),
        grid_spec=pltpu.PrefetchScalarGridSpec(
            num_scalar_prefetch=0,
            grid=grid,
            in_specs=[big, big, mspec],
            out_specs=pl.BlockSpec(memory_space=pltpu.MemorySpace.SMEM),
            scratch_shapes=[pltpu.SMEM((5,), jnp.float32)]),
        compiler_params=pltpu.CompilerParams(
            dimension_semantics=("arbitrary",),
            vmem_limit_bytes=_VMEM_LIMIT),
    )(raw_p, tgt_p, msk_p)


# ------------------------------ module port -------------------------------

class YoloLossPallas:
    MAX_TILE = 16384   # lanes per grid step; (2*n_ch+3)*TILE*4B*2buf stays well under VMEM

    def __init__(self, n_classes=1, n_anchors=3, batch=2, image_size=128,
                 iou_type='iou'):
        # image_size is parameterized (original hardcodes 608) so the demo can
        # run at small spatial sizes; everything else mirrors the PyTorch init.
        self.strides = [8, 16, 32]
        self.n_classes = n_classes
        self.n_anchors = n_anchors
        self.iou_type = iou_type
        self.anchors = [[12, 16], [19, 36], [40, 28], [36, 75], [76, 55],
                        [72, 146], [142, 110], [192, 243], [459, 401]]
        self.anch_masks = [[0, 1, 2], [3, 4, 5], [6, 7, 8]]
        self.ignore_thre = 0.5
        self.batch = batch
        self.image_size = image_size

        self.masked_anchors, self.ref_anchors = [], []
        self.anchor_w_py, self.anchor_h_py = [], []
        self.codes, self.tiles, self.mpads = [], [], []
        for i in range(3):
            all_anchors_grid = [(w / self.strides[i], h / self.strides[i])
                                for w, h in self.anchors]
            masked = np.array([all_anchors_grid[j] for j in self.anch_masks[i]],
                              dtype=np.float32)
            ref = np.zeros((len(all_anchors_grid), 4), dtype=np.float32)
            ref[:, 2:] = np.array(all_anchors_grid, dtype=np.float32)
            self.masked_anchors.append(jnp.asarray(masked))
            self.ref_anchors.append(jnp.asarray(ref))
            self.anchor_w_py.append(tuple(float(w) for w in masked[:, 0]))
            self.anchor_h_py.append(tuple(float(h) for h in masked[:, 1]))

            fs = image_size // self.strides[i]
            assert fs < 128, "cell coordinates are packed into 7 bits"
            M = batch * n_anchors * fs * fs
            tile, mpad = _pick_tiling(M, self.MAX_TILE)
            # packed cell code, precomputed & padded once (replaces gx/gy/aw/ah streams)
            idx = np.arange(mpad, dtype=np.int64)
            ci = idx % fs
            cj = (idx // fs) % fs
            ca = (idx // (fs * fs)) % n_anchors
            code = (ci | (cj << 7) | (ca << 14)).astype(np.int32)
            self.codes.append(jnp.asarray(code).reshape(1, mpad))
            self.tiles.append(int(tile))
            self.mpads.append(int(mpad))

        # jit the whole forward once: fuses the per-scale transpose/pad glue and
        # the build_target scatter loop with the two pallas_calls per scale.
        self._forward_jit = jax.jit(self._forward_impl)

    # ------------------------- build_target (JAX) -------------------------
    def build_target(self, pred_cf, labels, batchsize, fsize, n_ch, output_id):
        # pred_cf: (4, M) channel-first flat predictions, flatten order (b, a, j, i)
        B, A, fs = batchsize, self.n_anchors, fsize
        T = labels.shape[1]
        stride = self.strides[output_id]
        ref = self.ref_anchors[output_id]
        manch = self.masked_anchors[output_id]
        anch_mask = self.anch_masks[output_id]
        f32 = jnp.float32

        nlabel = jnp.sum((jnp.sum(labels, axis=2) > 0).astype(jnp.int32), axis=1)
        valid = jnp.arange(T)[None, :] < nlabel[:, None]                # (B,T)
        truth_x = (labels[:, :, 2] + labels[:, :, 0]) / (stride * 2)
        truth_y = (labels[:, :, 3] + labels[:, :, 1]) / (stride * 2)
        truth_w = (labels[:, :, 2] - labels[:, :, 0]) / stride
        truth_h = (labels[:, :, 3] - labels[:, :, 1]) / stride
        truth_i = truth_x.astype(jnp.int16).astype(jnp.int32)
        truth_j = truth_y.astype(jnp.int16).astype(jnp.int32)

        # IoU of (0,0,w,h) truth boxes vs reference anchors ('voc' fmt, 'iou')
        aw = ref[:, 2]
        ah = ref[:, 3]
        min_w = jnp.minimum(truth_w[..., None], aw[None, None, :])
        min_h = jnp.minimum(truth_h[..., None], ah[None, None, :])
        en = ((min_w > 0) & (min_h > 0)).astype(f32)
        inter = min_w * min_h * en
        union = truth_w[..., None] * truth_h[..., None] + (aw * ah)[None, None, :] - inter
        anchor_iou = inter / jnp.maximum(union, 1e-16)
        best_n_all = jnp.argmax(anchor_iou, axis=2)                     # (B,T)
        best_n = best_n_all % 3
        best_n_mask = ((best_n_all == anch_mask[0]) |
                       (best_n_all == anch_mask[1]) |
                       (best_n_all == anch_mask[2]))

        # IoU of predicted boxes vs truth boxes ('yolo' cx,cy,w,h fmt, 'iou')
        p = pred_cf.reshape(4, B, A * fs * fs)
        px, py, pw, ph = p[0], p[1], p[2], p[3]                         # (B, N)
        px1 = px - pw * 0.5
        py1 = py - ph * 0.5
        px2 = px + pw * 0.5
        py2 = py + ph * 0.5
        tx1 = truth_x - truth_w * 0.5
        ty1 = truth_y - truth_h * 0.5
        tx2 = truth_x + truth_w * 0.5
        ty2 = truth_y + truth_h * 0.5
        tl_x = jnp.maximum(px1[:, :, None], tx1[:, None, :])
        tl_y = jnp.maximum(py1[:, :, None], ty1[:, None, :])
        br_x = jnp.minimum(px2[:, :, None], tx2[:, None, :])
        br_y = jnp.minimum(py2[:, :, None], ty2[:, None, :])
        en2 = ((tl_x < br_x) & (tl_y < br_y)).astype(f32)
        inter2 = (br_x - tl_x) * (br_y - tl_y) * en2
        area_p = pw * ph
        area_t = truth_w * truth_h
        union2 = area_p[:, :, None] + area_t[:, None, :] - inter2
        iou = inter2 / jnp.maximum(union2, 1e-16)
        iou = jnp.where(valid[:, None, :], iou, -1.0)
        pred_best = (jnp.max(iou, axis=2) > self.ignore_thre).reshape(B, A, fs, fs)

        has_pos = jnp.any(best_n_mask & valid, axis=1)
        use_pred = (nlabel > 0) & has_pos                 # mirrors the two `continue`s
        obj_mask = jnp.where(use_pred[:, None, None, None],
                             1.0 - pred_best.astype(f32),
                             jnp.ones((B, A, fs, fs), f32))
        tgt_mask = jnp.zeros((B, A, fs, fs), f32)
        tgt_scale = jnp.zeros((B, A, fs, fs), f32)
        target = jnp.zeros((n_ch, B, A, fs, fs), f32)     # channel-first (no transpose later)

        write = valid & best_n_mask
        barange = jnp.arange(B)
        cls_all = labels[:, :, 4].astype(jnp.int32)
        for ti in range(T):                               # static unrolled loop
            w = write[:, ti]
            a = best_n[:, ti]
            jj = jnp.clip(truth_j[:, ti], 0, fs - 1)
            ii = jnp.clip(truth_i[:, ti], 0, fs - 1)
            tx = truth_x[:, ti]
            ty = truth_y[:, ti]
            tw = truth_w[:, ti]
            th = truth_h[:, ti]
            vx = tx - tx.astype(jnp.int16).astype(f32)
            vy = ty - ty.astype(jnp.int16).astype(f32)
            vw = jnp.log(tw / manch[a, 0] + 1e-16)
            vh = jnp.log(th / manch[a, 1] + 1e-16)
            vs = jnp.sqrt(2.0 - tw * th / fs / fs)
            cls = jnp.clip(cls_all[:, ti], 0, self.n_classes - 1)

            cur = obj_mask[barange, a, jj, ii]
            obj_mask = obj_mask.at[barange, a, jj, ii].set(jnp.where(w, 1.0, cur))
            cur = tgt_mask[barange, a, jj, ii]
            tgt_mask = tgt_mask.at[barange, a, jj, ii].set(jnp.where(w, 1.0, cur))
            cur = tgt_scale[barange, a, jj, ii]
            tgt_scale = tgt_scale.at[barange, a, jj, ii].set(jnp.where(w, vs, cur))

            tcur = target[:, barange, a, jj, ii]          # (n_ch, B)
            onehot = (jnp.arange(self.n_classes)[:, None] == cls[None, :]).astype(f32)
            tnew = jnp.concatenate(
                [jnp.stack([vx, vy, vw, vh, jnp.ones_like(vx)], axis=0), onehot],
                axis=0)                                   # (n_ch, B)
            target = target.at[:, barange, a, jj, ii].set(
                jnp.where(w[None, :], tnew, tcur))
        return obj_mask, tgt_mask, tgt_scale, target

    # ------------------------------ forward -------------------------------
    def _forward_impl(self, xin, labels):
        totals = jnp.zeros((5,), jnp.float32)
        A = self.n_anchors
        n_ch = 5 + self.n_classes
        for oid, output in enumerate(xin):
            B = output.shape[0]
            fs = output.shape[2]
            assert B == self.batch, "batch must match the __init__ batch (as in PyTorch)"
            M = B * A * fs * fs
            tile = self.tiles[oid]
            mpad = self.mpads[oid]
            padw = ((0, 0), (0, mpad - M))

            # single wrapper-side transpose per scale: NCHW -> channel-first flat
            raw = (output.reshape(B, A, n_ch, fs, fs)
                         .transpose(2, 0, 1, 3, 4)
                         .reshape(n_ch, M)
                         .astype(jnp.float32))
            raw_p = jnp.pad(raw, padw)

            pred_p = _decode_call(raw_p, self.codes[oid], n_ch, mpad, tile,
                                  self.anchor_w_py[oid], self.anchor_h_py[oid])
            pred_cf = pred_p[:, :M]                               # (4, M)

            obj_mask, tgt_mask, tgt_scale, target_cf = self.build_target(
                pred_cf, labels, B, fs, n_ch, oid)

            tgt_p = jnp.pad(target_cf.reshape(n_ch, M), padw)
            msk = jnp.stack([obj_mask.reshape(M),
                             tgt_mask.reshape(M),
                             tgt_scale.reshape(M)], axis=0)       # (3, M)
            msk_p = jnp.pad(msk, padw)

            totals = totals + _loss_call(raw_p, tgt_p, msk_p, n_ch, mpad, tile)

        loss_xy, loss_wh, loss_obj, loss_cls, loss_l2 = (totals[i] for i in range(5))
        loss = loss_xy + loss_wh + loss_obj + loss_cls
        return loss, loss_xy, loss_wh, loss_obj, loss_cls, loss_l2

    def forward(self, xin, labels):
        return self._forward_jit(xin, labels)

    __call__ = forward


# --------------------------------- main ------------------------------------

if __name__ == "__main__":
    B = 2
    n_classes = 1
    image_size = 128   # small stand-in for 608; strides [8,16,32] -> fsizes [16,8,4]
    yolo = YoloLossPallas(n_classes=n_classes, n_anchors=3, batch=B,
                          image_size=image_size)

    key = jax.random.PRNGKey(0)
    ks = jax.random.split(key, 8)
    n_ch = 5 + n_classes

    xin = []
    for i, s in enumerate(yolo.strides):
        fs = image_size // s
        xin.append(0.5 * jax.random.normal(ks[i], (B, 3 * n_ch, fs, fs), jnp.float32))

    # labels: (B, T, 5) = [x1, y1, x2, y2, class] in pixels; zero rows = padding
    T = 4
    cx = jax.random.uniform(ks[3], (B, T), minval=30.0, maxval=98.0)
    cy = jax.random.uniform(ks[4], (B, T), minval=30.0, maxval=98.0)
    bw = jax.random.uniform(ks[5], (B, T), minval=10.0, maxval=48.0)
    bh = jax.random.uniform(ks[6], (B, T), minval=10.0, maxval=48.0)
    cls = jnp.zeros((B, T), jnp.float32)
    labels = jnp.stack([cx - bw / 2, cy - bh / 2, cx + bw / 2, cy + bh / 2, cls],
                       axis=2)
    n_valid = jnp.array([3, 2])
    labels = labels * (jnp.arange(T)[None, :] < n_valid[:, None])[:, :, None].astype(jnp.float32)

    results = yolo(xin, labels)
    results = jax.block_until_ready(results)
    assert all(bool(jnp.isfinite(r)) for r in results), "non-finite loss"
    print("KERNEL_OK")
</pallas_src>

<mosaic_0001>
module attributes {stable_mosaic.version = 11 : i64} {
  func.func @_decode_kernel(%arg0: i32, %arg1: memref<6x128xf32, #tpu.memory_space<vmem>>, %arg2: memref<1x128xi32, #tpu.memory_space<vmem>>, %arg3: memref<4x128xf32, #tpu.memory_space<vmem>>) attributes {dimension_semantics = [#tpu.dimension_semantics<parallel>], iteration_bounds = array<i64: 1>, scalar_prefetch = 0 : i64, scratch_operands = 0 : i64, tpu.core_type = #tpu.core_type<tc>, window_params = [{transform_indices = @transform_0, window_bounds = array<i64: 6, 128>}, {transform_indices = @transform_1, window_bounds = array<i64: 1, 128>}, {transform_indices = @transform_2, window_bounds = array<i64: 4, 128>}]} {
    %c0 = arith.constant 0 : index
    %c0_0 = arith.constant 0 : index
    %0 = vector.load %arg2[%c0, %c0_0] : memref<1x128xi32, #tpu.memory_space<vmem>>, vector<1x128xi32>
    %c127_i32 = arith.constant 127 : i32
    %1 = vector.broadcast %c127_i32 : i32 to vector<1x128xi32>
    %2 = arith.andi %0, %1 : vector<1x128xi32>
    %3 = arith.sitofp %2 : vector<1x128xi32> to vector<1x128xf32>
    %c7_i32 = arith.constant 7 : i32
    %4 = vector.broadcast %c7_i32 : i32 to vector<1x128xi32>
    %5 = arith.shrsi %0, %4 : vector<1x128xi32>
    %c127_i32_1 = arith.constant 127 : i32
    %6 = vector.broadcast %c127_i32_1 : i32 to vector<1x128xi32>
    %7 = arith.andi %5, %6 : vector<1x128xi32>
    %8 = arith.sitofp %7 : vector<1x128xi32> to vector<1x128xf32>
    %c14_i32 = arith.constant 14 : i32
    %9 = vector.broadcast %c14_i32 : i32 to vector<1x128xi32>
    %10 = arith.shrsi %0, %9 : vector<1x128xi32>
    %c0_i32 = arith.constant 0 : i32
    %11 = vector.broadcast %c0_i32 : i32 to vector<1x128xi32>
    %12 = arith.cmpi eq, %10, %11 : vector<1x128xi32>
    %c1_i32 = arith.constant 1 : i32
    %13 = vector.broadcast %c1_i32 : i32 to vector<1x128xi32>
    %14 = arith.cmpi eq, %10, %13 : vector<1x128xi32>
    %cst = arith.constant 6.000000e+00 : f32
    %cst_2 = arith.constant 14.34375 : f32
    %15 = vector.broadcast %cst : f32 to vector<1x128xf32>
    %16 = vector.broadcast %cst_2 : f32 to vector<1x128xf32>
    %17 = arith.select %14, %15, %16 : vector<1x128xi1>, vector<1x128xf32>
    %cst_3 = arith.constant 4.437500e+00 : f32
    %18 = vector.broadcast %cst_3 : f32 to vector<1x128xf32>
    %19 = arith.select %12, %18, %17 : vector<1x128xi1>, vector<1x128xf32>
    %c0_i32_4 = arith.constant 0 : i32
    %20 = vector.broadcast %c0_i32_4 : i32 to vector<1x128xi32>
    %21 = arith.cmpi eq, %10, %20 : vector<1x128xi32>
    %c1_i32_5 = arith.constant 1 : i32
    %22 = vector.broadcast %c1_i32_5 : i32 to vector<1x128xi32>
    %23 = arith.cmpi eq, %10, %22 : vector<1x128xi32>
    %cst_6 = arith.constant 7.593750e+00 : f32
    %cst_7 = arith.constant 12.53125 : f32
    %24 = vector.broadcast %cst_6 : f32 to vector<1x128xf32>
    %25 = vector.broadcast %cst_7 : f32 to vector<1x128xf32>
    %26 = arith.select %23, %24, %25 : vector<1x128xi1>, vector<1x128xf32>
    %cst_8 = arith.constant 3.437500e+00 : f32
    %27 = vector.broadcast %cst_8 : f32 to vector<1x128xf32>
    %28 = arith.select %21, %27, %26 : vector<1x128xi1>, vector<1x128xf32>
    %c0_9 = arith.constant 0 : index
    %c0_10 = arith.constant 0 : index
    %29 = vector.load %arg1[%c0_9, %c0_10] : memref<6x128xf32, #tpu.memory_space<vmem>>, vector<1x128xf32>
    %30 = arith.negf %29 : vector<1x128xf32>
    %31 = math.exp %30 : vector<1x128xf32>
    %cst_11 = arith.constant 1.000000e+00 : f32
    %32 = vector.broadcast %cst_11 : f32 to vector<1x128xf32>
    %33 = arith.addf %32, %31 : vector<1x128xf32>
    %34 = arith.divf %32, %33 : vector<1x128xf32>
    %35 = arith.addf %34, %3 : vector<1x128xf32>
    %c0_12 = arith.constant 0 : index
    %c0_13 = arith.constant 0 : index
    %36 = vector.load %arg3[%c0_12, %c0_13] : memref<4x128xf32, #tpu.memory_space<vmem>>, vector<1x128xf32>
    tpu.vector_store %arg3[%c0_12, %c0_13], %35 {strides = array<i32>} : memref<4x128xf32, #tpu.memory_space<vmem>>, vector<1x128xf32>,
    %c1 = arith.constant 1 : index
    %c0_14 = arith.constant 0 : index
    %37 = vector.load %arg1[%c1, %c0_14] : memref<6x128xf32, #tpu.memory_space<vmem>>, vector<1x128xf32>
    %38 = arith.negf %37 : vector<1x128xf32>
    %39 = math.exp %38 : vector<1x128xf32>
    %cst_15 = arith.constant 1.000000e+00 : f32
    %40 = vector.broadcast %cst_15 : f32 to vector<1x128xf32>
    %41 = arith.addf %40, %39 : vector<1x128xf32>
    %42 = arith.divf %40, %41 : vector<1x128xf32>
    %43 = arith.addf %42, %8 : vector<1x128xf32>
    %c1_16 = arith.constant 1 : index
    %c0_17 = arith.constant 0 : index
    %44 = vector.load %arg3[%c1_16, %c0_17] : memref<4x128xf32, #tpu.memory_space<vmem>>, vector<1x128xf32>
    tpu.vector_store %arg3[%c1_16, %c0_17], %43 {strides = array<i32>} : memref<4x128xf32, #tpu.memory_space<vmem>>, vector<1x128xf32>,
    %c2 = arith.constant 2 : index
    %c0_18 = arith.constant 0 : index
    %45 = vector.load %arg1[%c2, %c0_18] : memref<6x128xf32, #tpu.memory_space<vmem>>, vector<1x128xf32>
    %46 = math.exp %45 : vector<1x128xf32>
    %47 = arith.mulf %46, %19 : vector<1x128xf32>
    %c2_19 = arith.constant 2 : index
    %c0_20 = arith.constant 0 : index
    %48 = vector.load %arg3[%c2_19, %c0_20] : memref<4x128xf32, #tpu.memory_space<vmem>>, vector<1x128xf32>
    tpu.vector_store %arg3[%c2_19, %c0_20], %47 {strides = array<i32>} : memref<4x128xf32, #tpu.memory_space<vmem>>, vector<1x128xf32>,
    %c3 = arith.constant 3 : index
    %c0_21 = arith.constant 0 : index
    %49 = vector.load %arg1[%c3, %c0_21] : memref<6x128xf32, #tpu.memory_space<vmem>>, vector<1x128xf32>
    %50 = math.exp %49 : vector<1x128xf32>
    %51 = arith.mulf %50, %28 : vector<1x128xf32>
    %c3_22 = arith.constant 3 : index
    %c0_23 = arith.constant 0 : index
    %52 = vector.load %arg3[%c3_22, %c0_23] : memref<4x128xf32, #tpu.memory_space<vmem>>, vector<1x128xf32>
    tpu.vector_store %arg3[%c3_22, %c0_23], %51 {strides = array<i32>} : memref<4x128xf32, #tpu.memory_space<vmem>>, vector<1x128xf32>,
    return
  }
  func.func @transform_0(%arg0: i32) -> (i32, i32) {
    %c0_i32 = arith.constant 0 : i32
    %c0_i32_0 = arith.constant 0 : i32
    return %c0_i32, %arg0 : i32, i32
  }
  func.func @transform_1(%arg0: i32) -> (i32, i32) {
    %c0_i32 = arith.constant 0 : i32
    %c0_i32_0 = arith.constant 0 : i32
    return %c0_i32, %arg0 : i32, i32
  }
  func.func @transform_2(%arg0: i32) -> (i32, i32) {
    %c0_i32 = arith.constant 0 : i32
    %c0_i32_0 = arith.constant 0 : i32
    return %c0_i32, %arg0 : i32, i32
  }
}

module attributes {stable_mosaic.version = 11 : i64} {
  func.func @_loss_kernel(%arg0: i32, %arg1: memref<6x128xf32, #tpu.memory_space<vmem>>, %arg2: memref<6x128xf32, #tpu.memory_space<vmem>>, %arg3: memref<3x128xf32, #tpu.memory_space<vmem>>, %arg4: memref<5xf32, #tpu.memory_space<smem>>, %arg5: memref<5xf32, #tpu.memory_space<smem>>) attributes {dimension_semantics = [#tpu.dimension_semantics<arbitrary>], iteration_bounds = array<i64: 1>, scalar_prefetch = 0 : i64, scratch_operands = 1 : i64, tpu.core_type = #tpu.core_type<tc>, window_params = [{transform_indices = @transform_0, window_bounds = array<i64: 6, 128>}, {transform_indices = @transform_1, window_bounds = array<i64: 6, 128>}, {transform_indices = @transform_2, window_bounds = array<i64: 3, 128>}, {transform_indices = @transform_3, window_bounds = array<i64: 5>}]} {
    %c0_i32 = arith.constant 0 : i32
    %0 = arith.cmpi eq, %arg0, %c0_i32 : i32
    %1 = arith.extui %0 : i1 to i32
    %c0_i32_0 = arith.constant 0 : i32
    %2 = arith.cmpi ne, %1, %c0_i32_0 : i32
    scf.if %2 {
      %cst_32 = arith.constant 0.000000e+00 : f32
      %c0_33 = arith.constant 0 : index
      %114 = memref.load %arg5[%c0_33] : memref<5xf32, #tpu.memory_space<smem>>
      memref.store %cst_32, %arg5[%c0_33] : memref<5xf32, #tpu.memory_space<smem>>
      %cst_34 = arith.constant 0.000000e+00 : f32
      %c1_35 = arith.constant 1 : index
      %115 = memref.load %arg5[%c1_35] : memref<5xf32, #tpu.memory_space<smem>>
      memref.store %cst_34, %arg5[%c1_35] : memref<5xf32, #tpu.memory_space<smem>>
      %cst_36 = arith.constant 0.000000e+00 : f32
      %c2_37 = arith.constant 2 : index
      %116 = memref.load %arg5[%c2_37] : memref<5xf32, #tpu.memory_space<smem>>
      memref.store %cst_36, %arg5[%c2_37] : memref<5xf32, #tpu.memory_space<smem>>
      %cst_38 = arith.constant 0.000000e+00 : f32
      %c3_39 = arith.constant 3 : index
      %117 = memref.load %arg5[%c3_39] : memref<5xf32, #tpu.memory_space<smem>>
      memref.store %cst_38, %arg5[%c3_39] : memref<5xf32, #tpu.memory_space<smem>>
      %cst_40 = arith.constant 0.000000e+00 : f32
      %c4_41 = arith.constant 4 : index
      %118 = memref.load %arg5[%c4_41] : memref<5xf32, #tpu.memory_space<smem>>
      memref.store %cst_40, %arg5[%c4_41] : memref<5xf32, #tpu.memory_space<smem>>
    } else {
    }
    %c0 = arith.constant 0 : index
    %c0_1 = arith.constant 0 : index
    %3 = vector.load %arg1[%c0, %c0_1] : memref<6x128xf32, #tpu.memory_space<vmem>>, vector<6x128xf32>
    %c0_2 = arith.constant 0 : index
    %c0_3 = arith.constant 0 : index
    %4 = vector.load %arg2[%c0_2, %c0_3] : memref<6x128xf32, #tpu.memory_space<vmem>>, vector<6x128xf32>
    %c0_4 = arith.constant 0 : index
    %c0_5 = arith.constant 0 : index
    %5 = vector.load %arg3[%c0_4, %c0_5] : memref<3x128xf32, #tpu.memory_space<vmem>>, vector<1x128xf32>
    %c1 = arith.constant 1 : index
    %c0_6 = arith.constant 0 : index
    %6 = vector.load %arg3[%c1, %c0_6] : memref<3x128xf32, #tpu.memory_space<vmem>>, vector<1x128xf32>
    %c2 = arith.constant 2 : index
    %c0_7 = arith.constant 0 : index
    %7 = vector.load %arg3[%c2, %c0_7] : memref<3x128xf32, #tpu.memory_space<vmem>>, vector<1x128xf32>
    %8 = tpu.iota {dimensions = array<i32: 0>} : vector<6x128xi32>
    %c2_i32 = arith.constant 2 : i32
    %9 = vector.broadcast %c2_i32 : i32 to vector<6x128xi32>
    %10 = arith.cmpi eq, %8, %9 : vector<6x128xi32>
    %c3_i32 = arith.constant 3 : i32
    %11 = vector.broadcast %c3_i32 : i32 to vector<6x128xi32>
    %12 = arith.cmpi eq, %8, %11 : vector<6x128xi32>
    %13 = arith.ori %10, %12 : vector<6x128xi1>
    %14 = arith.negf %3 : vector<6x128xf32>
    %15 = math.exp %14 : vector<6x128xf32>
    %cst = arith.constant 1.000000e+00 : f32
    %16 = vector.broadcast %cst : f32 to vector<6x128xf32>
    %17 = arith.addf %16, %15 : vector<6x128xf32>
    %18 = arith.divf %16, %17 : vector<6x128xf32>
    %19 = math.log %18 : vector<6x128xf32>
    %cst_8 = arith.constant -1.000000e+02 : f32
    %20 = vector.broadcast %cst_8 : f32 to vector<6x128xf32>
    %21 = arith.maximumf %19, %20 : vector<6x128xf32>
    %cst_9 = arith.constant 1.000000e+00 : f32
    %22 = vector.broadcast %cst_9 : f32 to vector<6x128xf32>
    %23 = arith.subf %22, %18 : vector<6x128xf32>
    %24 = math.log %23 : vector<6x128xf32>
    %cst_10 = arith.constant -1.000000e+02 : f32
    %25 = vector.broadcast %cst_10 : f32 to vector<6x128xf32>
    %26 = arith.maximumf %24, %25 : vector<6x128xf32>
    %27 = arith.mulf %4, %21 : vector<6x128xf32>
    %cst_11 = arith.constant 1.000000e+00 : f32
    %28 = vector.broadcast %cst_11 : f32 to vector<6x128xf32>
    %29 = arith.subf %28, %4 : vector<6x128xf32>
    %30 = arith.mulf %29, %26 : vector<6x128xf32>
    %31 = arith.addf %27, %30 : vector<6x128xf32>
    %cst_12 = arith.constant 0.000000e+00 : f32
    %32 = vector.broadcast %cst_12 : f32 to vector<6x128xf32>
    %33 = arith.subf %32, %31 : vector<6x128xf32>
    %34 = arith.subf %18, %4 : vector<6x128xf32>
    %35 = arith.subf %18, %4 : vector<6x128xf32>
    %36 = arith.mulf %34, %35 : vector<6x128xf32>
    %37 = arith.mulf %7, %7 : vector<1x128xf32>
    %38 = arith.subf %3, %4 : vector<6x128xf32>
    %39 = arith.subf %3, %4 : vector<6x128xf32>
    %40 = arith.mulf %38, %39 : vector<6x128xf32>
    %41 = vector.broadcast %37 : vector<1x128xf32> to vector<6x128xf32>
    %42 = arith.mulf %41, %40 : vector<6x128xf32>
    %c4_i32 = arith.constant 4 : i32
    %43 = vector.broadcast %c4_i32 : i32 to vector<6x128xi32>
    %44 = arith.cmpi eq, %8, %43 : vector<6x128xi32>
    %45 = vector.shape_cast %5 : vector<1x128xf32> to vector<1x128xf32>
    %46 = vector.broadcast %45 : vector<1x128xf32> to vector<6x128xf32>
    %47 = vector.shape_cast %6 : vector<1x128xf32> to vector<1x128xf32>
    %48 = vector.broadcast %47 : vector<1x128xf32> to vector<6x128xf32>
    %49 = arith.select %44, %46, %48 : vector<6x128xi1>, vector<6x128xf32>
    %cst_13 = arith.constant 0.000000e+00 : f32
    %50 = vector.broadcast %cst_13 : f32 to vector<6x128xf32>
    %c2_i32_14 = arith.constant 2 : i32
    %51 = vector.broadcast %c2_i32_14 : i32 to vector<6x128xi32>
    %52 = arith.cmpi slt, %8, %51 : vector<6x128xi32>
    %53 = arith.mulf %7, %7 : vector<1x128xf32>
    %54 = arith.mulf %6, %53 : vector<1x128xf32>
    %55 = vector.broadcast %54 : vector<1x128xf32> to vector<6x128xf32>
    %56 = arith.mulf %55, %33 : vector<6x128xf32>
    %57 = arith.select %52, %56, %50 : vector<6x128xi1>, vector<6x128xf32>
    %58 = vector.broadcast %6 : vector<1x128xf32> to vector<6x128xf32>
    %59 = arith.mulf %58, %42 : vector<6x128xf32>
    %60 = arith.select %13, %59, %50 : vector<6x128xi1>, vector<6x128xf32>
    %c4_i32_15 = arith.constant 4 : i32
    %61 = vector.broadcast %c4_i32_15 : i32 to vector<6x128xi32>
    %62 = arith.cmpi eq, %8, %61 : vector<6x128xi32>
    %63 = vector.broadcast %5 : vector<1x128xf32> to vector<6x128xf32>
    %64 = arith.mulf %63, %33 : vector<6x128xf32>
    %65 = arith.select %62, %64, %50 : vector<6x128xi1>, vector<6x128xf32>
    %c5_i32 = arith.constant 5 : i32
    %66 = vector.broadcast %c5_i32 : i32 to vector<6x128xi32>
    %67 = arith.cmpi sge, %8, %66 : vector<6x128xi32>
    %68 = vector.broadcast %6 : vector<1x128xf32> to vector<6x128xf32>
    %69 = arith.mulf %68, %33 : vector<6x128xf32>
    %70 = arith.select %67, %69, %50 : vector<6x128xi1>, vector<6x128xf32>
    %71 = vector.broadcast %6 : vector<1x128xf32> to vector<6x128xf32>
    %72 = arith.mulf %71, %42 : vector<6x128xf32>
    %73 = arith.mulf %49, %36 : vector<6x128xf32>
    %74 = arith.select %13, %72, %73 : vector<6x128xi1>, vector<6x128xf32>
    %c0_16 = arith.constant 0 : index
    %75 = memref.load %arg5[%c0_16] : memref<5xf32, #tpu.memory_space<smem>>
    %76 = vector.shape_cast %57 : vector<6x128xf32> to vector<1x6x128xf32>
    %cst_17 = arith.constant dense<0.000000e+00> : vector<1xf32>
    %77 = vector.multi_reduction <add>, %76, %cst_17 [1, 2] : vector<1x6x128xf32> to vector<1xf32>
    %78 = vector.shape_cast %77 : vector<1xf32> to vector<1x1x1xf32>
    %79 = vector.extract %78[0, 0, 0] : f32 from vector<1x1x1xf32>
    %80 = arith.addf %75, %79 : f32
    %c0_18 = arith.constant 0 : index
    %81 = memref.load %arg5[%c0_18] : memref<5xf32, #tpu.memory_space<smem>>
    memref.store %80, %arg5[%c0_18] : memref<5xf32, #tpu.memory_space<smem>>
    %c1_19 = arith.constant 1 : index
    %82 = memref.load %arg5[%c1_19] : memref<5xf32, #tpu.memory_space<smem>>
    %83 = vector.shape_cast %60 : vector<6x128xf32> to vector<1x6x128xf32>
    %cst_20 = arith.constant dense<0.000000e+00> : vector<1xf32>
    %84 = vector.multi_reduction <add>, %83, %cst_20 [1, 2] : vector<1x6x128xf32> to vector<1xf32>
    %85 = vector.shape_cast %84 : vector<1xf32> to vector<1x1x1xf32>
    %86 = vector.extract %85[0, 0, 0] : f32 from vector<1x1x1xf32>
    %cst_21 = arith.constant 5.000000e-01 : f32
    %87 = arith.mulf %cst_21, %86 : f32
    %88 = arith.addf %82, %87 : f32
    %c1_22 = arith.constant 1 : index
    %89 = memref.load %arg5[%c1_22] : memref<5xf32, #tpu.memory_space<smem>>
    memref.store %88, %arg5[%c1_22] : memref<5xf32, #tpu.memory_space<smem>>
    %c2_23 = arith.constant 2 : index
    %90 = memref.load %arg5[%c2_23] : memref<5xf32, #tpu.memory_space<smem>>
    %91 = vector.shape_cast %65 : vector<6x128xf32> to vector<1x6x128xf32>
    %cst_24 = arith.constant dense<0.000000e+00> : vector<1xf32>
    %92 = vector.multi_reduction <add>, %91, %cst_24 [1, 2] : vector<1x6x128xf32> to vector<1xf32>
    %93 = vector.shape_cast %92 : vector<1xf32> to vector<1x1x1xf32>
    %94 = vector.extract %93[0, 0, 0] : f32 from vector<1x1x1xf32>
    %95 = arith.addf %90, %94 : f32
    %c2_25 = arith.constant 2 : index
    %96 = memref.load %arg5[%c2_25] : memref<5xf32, #tpu.memory_space<smem>>
    memref.store %95, %arg5[%c2_25] : memref<5xf32, #tpu.memory_space<smem>>
    %c3 = arith.constant 3 : index
    %97 = memref.load %arg5[%c3] : memref<5xf32, #tpu.memory_space<smem>>
    %98 = vector.shape_cast %70 : vector<6x128xf32> to vector<1x6x128xf32>
    %cst_26 = arith.constant dense<0.000000e+00> : vector<1xf32>
    %99 = vector.multi_reduction <add>, %98, %cst_26 [1, 2] : vector<1x6x128xf32> to vector<1xf32>
    %100 = vector.shape_cast %99 : vector<1xf32> to vector<1x1x1xf32>
    %101 = vector.extract %100[0, 0, 0] : f32 from vector<1x1x1xf32>
    %102 = arith.addf %97, %101 : f32
    %c3_27 = arith.constant 3 : index
    %103 = memref.load %arg5[%c3_27] : memref<5xf32, #tpu.memory_space<smem>>
    memref.store %102, %arg5[%c3_27] : memref<5xf32, #tpu.memory_space<smem>>
    %c4 = arith.constant 4 : index
    %104 = memref.load %arg5[%c4] : memref<5xf32, #tpu.memory_space<smem>>
    %105 = vector.shape_cast %74 : vector<6x128xf32> to vector<1x6x128xf32>
    %cst_28 = arith.constant dense<0.000000e+00> : vector<1xf32>
    %106 = vector.multi_reduction <add>, %105, %cst_28 [1, 2] : vector<1x6x128xf32> to vector<1xf32>
    %107 = vector.shape_cast %106 : vector<1xf32> to vector<1x1x1xf32>
    %108 = vector.extract %107[0, 0, 0] : f32 from vector<1x1x1xf32>
    %109 = arith.addf %104, %108 : f32
    %c4_29 = arith.constant 4 : index
    %110 = memref.load %arg5[%c4_29] : memref<5xf32, #tpu.memory_space<smem>>
    memref.store %109, %arg5[%c4_29] : memref<5xf32, #tpu.memory_space<smem>>
    %c0_i32_30 = arith.constant 0 : i32
    %111 = arith.cmpi eq, %arg0, %c0_i32_30 : i32
    %112 = arith.extui %111 : i1 to i32
    %c0_i32_31 = arith.constant 0 : i32
    %113 = arith.cmpi ne, %112, %c0_i32_31 : i32
    scf.if %113 {
      %c0_32 = arith.constant 0 : index
      %114 = memref.load %arg5[%c0_32] : memref<5xf32, #tpu.memory_space<smem>>
      %c0_33 = arith.constant 0 : index
      %115 = memref.load %arg4[%c0_33] : memref<5xf32, #tpu.memory_space<smem>>
      memref.store %114, %arg4[%c0_33] : memref<5xf32, #tpu.memory_space<smem>>
      %c1_34 = arith.constant 1 : index
      %116 = memref.load %arg5[%c1_34] : memref<5xf32, #tpu.memory_space<smem>>
      %c1_35 = arith.constant 1 : index
      %117 = memref.load %arg4[%c1_35] : memref<5xf32, #tpu.memory_space<smem>>
      memref.store %116, %arg4[%c1_35] : memref<5xf32, #tpu.memory_space<smem>>
      %c2_36 = arith.constant 2 : index
      %118 = memref.load %arg5[%c2_36] : memref<5xf32, #tpu.memory_space<smem>>
      %c2_37 = arith.constant 2 : index
      %119 = memref.load %arg4[%c2_37] : memref<5xf32, #tpu.memory_space<smem>>
      memref.store %118, %arg4[%c2_37] : memref<5xf32, #tpu.memory_space<smem>>
      %c3_38 = arith.constant 3 : index
      %120 = memref.load %arg5[%c3_38] : memref<5xf32, #tpu.memory_space<smem>>
      %c3_39 = arith.constant 3 : index
      %121 = memref.load %arg4[%c3_39] : memref<5xf32, #tpu.memory_space<smem>>
      memref.store %120, %arg4[%c3_39] : memref<5xf32, #tpu.memory_space<smem>>
      %c4_40 = arith.constant 4 : index
      %122 = memref.load %arg5[%c4_40] : memref<5xf32, #tpu.memory_space<smem>>
      %c4_41 = arith.constant 4 : index
      %123 = memref.load %arg4[%c4_41] : memref<5xf32, #tpu.memory_space<smem>>
      memref.store %122, %arg4[%c4_41] : memref<5xf32, #tpu.memory_space<smem>>
    } else {
    }
    return
  }
  func.func @transform_0(%arg0: i32) -> (i32, i32) {
    %c0_i32 = arith.constant 0 : i32
    %c0_i32_0 = arith.constant 0 : i32
    return %c0_i32, %arg0 : i32, i32
  }
  func.func @transform_1(%arg0: i32) -> (i32, i32) {
    %c0_i32 = arith.constant 0 : i32
    %c0_i32_0 = arith.constant 0 : i32
    return %c0_i32, %arg0 : i32, i32
  }
  func.func @transform_2(%arg0: i32) -> (i32, i32) {
    %c0_i32 = arith.constant 0 : i32
    %c0_i32_0 = arith.constant 0 : i32
    return %c0_i32, %arg0 : i32, i32
  }
  func.func @transform_3(%arg0: i32) -> i32 {
    %c0_i32 = arith.constant 0 : i32
    %c0_i32_0 = arith.constant 0 : i32
    return %c0_i32 : i32
  }
}

module attributes {stable_mosaic.version = 11 : i64} {
  func.func @_decode_kernel(%arg0: i32, %arg1: memref<6x384xf32, #tpu.memory_space<vmem>>, %arg2: memref<1x384xi32, #tpu.memory_space<vmem>>, %arg3: memref<4x384xf32, #tpu.memory_space<vmem>>) attributes {dimension_semantics = [#tpu.dimension_semantics<parallel>], iteration_bounds = array<i64: 1>, scalar_prefetch = 0 : i64, scratch_operands = 0 : i64, tpu.core_type = #tpu.core_type<tc>, window_params = [{transform_indices = @transform_0, window_bounds = array<i64: 6, 384>}, {transform_indices = @transform_1, window_bounds = array<i64: 1, 384>}, {transform_indices = @transform_2, window_bounds = array<i64: 4, 384>}]} {
    %c0 = arith.constant 0 : index
    %c0_0 = arith.constant 0 : index
    %0 = vector.load %arg2[%c0, %c0_0] : memref<1x384xi32, #tpu.memory_space<vmem>>, vector<1x384xi32>
    %c127_i32 = arith.constant 127 : i32
    %1 = vector.broadcast %c127_i32 : i32 to vector<1x384xi32>
    %2 = arith.andi %0, %1 : vector<1x384xi32>
    %3 = arith.sitofp %2 : vector<1x384xi32> to vector<1x384xf32>
    %c7_i32 = arith.constant 7 : i32
    %4 = vector.broadcast %c7_i32 : i32 to vector<1x384xi32>
    %5 = arith.shrsi %0, %4 : vector<1x384xi32>
    %c127_i32_1 = arith.constant 127 : i32
    %6 = vector.broadcast %c127_i32_1 : i32 to vector<1x384xi32>
    %7 = arith.andi %5, %6 : vector<1x384xi32>
    %8 = arith.sitofp %7 : vector<1x384xi32> to vector<1x384xf32>
    %c14_i32 = arith.constant 14 : i32
    %9 = vector.broadcast %c14_i32 : i32 to vector<1x384xi32>
    %10 = arith.shrsi %0, %9 : vector<1x384xi32>
    %c0_i32 = arith.constant 0 : i32
    %11 = vector.broadcast %c0_i32 : i32 to vector<1x384xi32>
    %12 = arith.cmpi eq, %10, %11 : vector<1x384xi32>
    %c1_i32 = arith.constant 1 : i32
    %13 = vector.broadcast %c1_i32 : i32 to vector<1x384xi32>
    %14 = arith.cmpi eq, %10, %13 : vector<1x384xi32>
    %cst = arith.constant 4.750000e+00 : f32
    %cst_2 = arith.constant 4.500000e+00 : f32
    %15 = vector.broadcast %cst : f32 to vector<1x384xf32>
    %16 = vector.broadcast %cst_2 : f32 to vector<1x384xf32>
    %17 = arith.select %14, %15, %16 : vector<1x384xi1>, vector<1x384xf32>
    %cst_3 = arith.constant 2.250000e+00 : f32
    %18 = vector.broadcast %cst_3 : f32 to vector<1x384xf32>
    %19 = arith.select %12, %18, %17 : vector<1x384xi1>, vector<1x384xf32>
    %c0_i32_4 = arith.constant 0 : i32
    %20 = vector.broadcast %c0_i32_4 : i32 to vector<1x384xi32>
    %21 = arith.cmpi eq, %10, %20 : vector<1x384xi32>
    %c1_i32_5 = arith.constant 1 : i32
    %22 = vector.broadcast %c1_i32_5 : i32 to vector<1x384xi32>
    %23 = arith.cmpi eq, %10, %22 : vector<1x384xi32>
    %cst_6 = arith.constant 3.437500e+00 : f32
    %cst_7 = arith.constant 9.125000e+00 : f32
    %24 = vector.broadcast %cst_6 : f32 to vector<1x384xf32>
    %25 = vector.broadcast %cst_7 : f32 to vector<1x384xf32>
    %26 = arith.select %23, %24, %25 : vector<1x384xi1>, vector<1x384xf32>
    %cst_8 = arith.constant 4.687500e+00 : f32
    %27 = vector.broadcast %cst_8 : f32 to vector<1x384xf32>
    %28 = arith.select %21, %27, %26 : vector<1x384xi1>, vector<1x384xf32>
    %c0_9 = arith.constant 0 : index
    %c0_10 = arith.constant 0 : index
    %29 = vector.load %arg1[%c0_9, %c0_10] : memref<6x384xf32, #tpu.memory_space<vmem>>, vector<1x384xf32>
    %30 = arith.negf %29 : vector<1x384xf32>
    %31 = math.exp %30 : vector<1x384xf32>
    %cst_11 = arith.constant 1.000000e+00 : f32
    %32 = vector.broadcast %cst_11 : f32 to vector<1x384xf32>
    %33 = arith.addf %32, %31 : vector<1x384xf32>
    %34 = arith.divf %32, %33 : vector<1x384xf32>
    %35 = arith.addf %34, %3 : vector<1x384xf32>
    %c0_12 = arith.constant 0 : index
    %c0_13 = arith.constant 0 : index
    %36 = vector.load %arg3[%c0_12, %c0_13] : memref<4x384xf32, #tpu.memory_space<vmem>>, vector<1x384xf32>
    tpu.vector_store %arg3[%c0_12, %c0_13], %35 {strides = array<i32>} : memref<4x384xf32, #tpu.memory_space<vmem>>, vector<1x384xf32>,
    %c1 = arith.constant 1 : index
    %c0_14 = arith.constant 0 : index
    %37 = vector.load %arg1[%c1, %c0_14] : memref<6x384xf32, #tpu.memory_space<vmem>>, vector<1x384xf32>
    %38 = arith.negf %37 : vector<1x384xf32>
    %39 = math.exp %38 : vector<1x384xf32>
    %cst_15 = arith.constant 1.000000e+00 : f32
    %40 = vector.broadcast %cst_15 : f32 to vector<1x384xf32>
    %41 = arith.addf %40, %39 : vector<1x384xf32>
    %42 = arith.divf %40, %41 : vector<1x384xf32>
    %43 = arith.addf %42, %8 : vector<1x384xf32>
    %c1_16 = arith.constant 1 : index
    %c0_17 = arith.constant 0 : index
    %44 = vector.load %arg3[%c1_16, %c0_17] : memref<4x384xf32, #tpu.memory_space<vmem>>, vector<1x384xf32>
    tpu.vector_store %arg3[%c1_16, %c0_17], %43 {strides = array<i32>} : memref<4x384xf32, #tpu.memory_space<vmem>>, vector<1x384xf32>,
    %c2 = arith.constant 2 : index
    %c0_18 = arith.constant 0 : index
    %45 = vector.load %arg1[%c2, %c0_18] : memref<6x384xf32, #tpu.memory_space<vmem>>, vector<1x384xf32>
    %46 = math.exp %45 : vector<1x384xf32>
    %47 = arith.mulf %46, %19 : vector<1x384xf32>
    %c2_19 = arith.constant 2 : index
    %c0_20 = arith.constant 0 : index
    %48 = vector.load %arg3[%c2_19, %c0_20] : memref<4x384xf32, #tpu.memory_space<vmem>>, vector<1x384xf32>
    tpu.vector_store %arg3[%c2_19, %c0_20], %47 {strides = array<i32>} : memref<4x384xf32, #tpu.memory_space<vmem>>, vector<1x384xf32>,
    %c3 = arith.constant 3 : index
    %c0_21 = arith.constant 0 : index
    %49 = vector.load %arg1[%c3, %c0_21] : memref<6x384xf32, #tpu.memory_space<vmem>>, vector<1x384xf32>
    %50 = math.exp %49 : vector<1x384xf32>
    %51 = arith.mulf %50, %28 : vector<1x384xf32>
    %c3_22 = arith.constant 3 : index
    %c0_23 = arith.constant 0 : index
    %52 = vector.load %arg3[%c3_22, %c0_23] : memref<4x384xf32, #tpu.memory_space<vmem>>, vector<1x384xf32>
    tpu.vector_store %arg3[%c3_22, %c0_23], %51 {strides = array<i32>} : memref<4x384xf32, #tpu.memory_space<vmem>>, vector<1x384xf32>,
    return
  }
  func.func @transform_0(%arg0: i32) -> (i32, i32) {
    %c0_i32 = arith.constant 0 : i32
    %c0_i32_0 = arith.constant 0 : i32
    return %c0_i32, %arg0 : i32, i32
  }
  func.func @transform_1(%arg0: i32) -> (i32, i32) {
    %c0_i32 = arith.constant 0 : i32
    %c0_i32_0 = arith.constant 0 : i32
    return %c0_i32, %arg0 : i32, i32
  }
  func.func @transform_2(%arg0: i32) -> (i32, i32) {
    %c0_i32 = arith.constant 0 : i32
    %c0_i32_0 = arith.constant 0 : i32
    return %c0_i32, %arg0 : i32, i32
  }
}

module attributes {stable_mosaic.version = 11 : i64} {
  func.func @_loss_kernel(%arg0: i32, %arg1: memref<6x384xf32, #tpu.memory_space<vmem>>, %arg2: memref<6x384xf32, #tpu.memory_space<vmem>>, %arg3: memref<3x384xf32, #tpu.memory_space<vmem>>, %arg4: memref<5xf32, #tpu.memory_space<smem>>, %arg5: memref<5xf32, #tpu.memory_space<smem>>) attributes {dimension_semantics = [#tpu.dimension_semantics<arbitrary>], iteration_bounds = array<i64: 1>, scalar_prefetch = 0 : i64, scratch_operands = 1 : i64, tpu.core_type = #tpu.core_type<tc>, window_params = [{transform_indices = @transform_0, window_bounds = array<i64: 6, 384>}, {transform_indices = @transform_1, window_bounds = array<i64: 6, 384>}, {transform_indices = @transform_2, window_bounds = array<i64: 3, 384>}, {transform_indices = @transform_3, window_bounds = array<i64: 5>}]} {
    %c0_i32 = arith.constant 0 : i32
    %0 = arith.cmpi eq, %arg0, %c0_i32 : i32
    %1 = arith.extui %0 : i1 to i32
    %c0_i32_0 = arith.constant 0 : i32
    %2 = arith.cmpi ne, %1, %c0_i32_0 : i32
    scf.if %2 {
      %cst_32 = arith.constant 0.000000e+00 : f32
      %c0_33 = arith.constant 0 : index
      %114 = memref.load %arg5[%c0_33] : memref<5xf32, #tpu.memory_space<smem>>
      memref.store %cst_32, %arg5[%c0_33] : memref<5xf32, #tpu.memory_space<smem>>
      %cst_34 = arith.constant 0.000000e+00 : f32
      %c1_35 = arith.constant 1 : index
      %115 = memref.load %arg5[%c1_35] : memref<5xf32, #tpu.memory_space<smem>>
      memref.store %cst_34, %arg5[%c1_35] : memref<5xf32, #tpu.memory_space<smem>>
      %cst_36 = arith.constant 0.000000e+00 : f32
      %c2_37 = arith.constant 2 : index
      %116 = memref.load %arg5[%c2_37] : memref<5xf32, #tpu.memory_space<smem>>
      memref.store %cst_36, %arg5[%c2_37] : memref<5xf32, #tpu.memory_space<smem>>
      %cst_38 = arith.constant 0.000000e+00 : f32
      %c3_39 = arith.constant 3 : index
      %117 = memref.load %arg5[%c3_39] : memref<5xf32, #tpu.memory_space<smem>>
      memref.store %cst_38, %arg5[%c3_39] : memref<5xf32, #tpu.memory_space<smem>>
      %cst_40 = arith.constant 0.000000e+00 : f32
      %c4_41 = arith.constant 4 : index
      %118 = memref.load %arg5[%c4_41] : memref<5xf32, #tpu.memory_space<smem>>
      memref.store %cst_40, %arg5[%c4_41] : memref<5xf32, #tpu.memory_space<smem>>
    } else {
    }
    %c0 = arith.constant 0 : index
    %c0_1 = arith.constant 0 : index
    %3 = vector.load %arg1[%c0, %c0_1] : memref<6x384xf32, #tpu.memory_space<vmem>>, vector<6x384xf32>
    %c0_2 = arith.constant 0 : index
    %c0_3 = arith.constant 0 : index
    %4 = vector.load %arg2[%c0_2, %c0_3] : memref<6x384xf32, #tpu.memory_space<vmem>>, vector<6x384xf32>
    %c0_4 = arith.constant 0 : index
    %c0_5 = arith.constant 0 : index
    %5 = vector.load %arg3[%c0_4, %c0_5] : memref<3x384xf32, #tpu.memory_space<vmem>>, vector<1x384xf32>
    %c1 = arith.constant 1 : index
    %c0_6 = arith.constant 0 : index
    %6 = vector.load %arg3[%c1, %c0_6] : memref<3x384xf32, #tpu.memory_space<vmem>>, vector<1x384xf32>
    %c2 = arith.constant 2 : index
    %c0_7 = arith.constant 0 : index
    %7 = vector.load %arg3[%c2, %c0_7] : memref<3x384xf32, #tpu.memory_space<vmem>>, vector<1x384xf32>
    %8 = tpu.iota {dimensions = array<i32: 0>} : vector<6x384xi32>
    %c2_i32 = arith.constant 2 : i32
    %9 = vector.broadcast %c2_i32 : i32 to vector<6x384xi32>
    %10 = arith.cmpi eq, %8, %9 : vector<6x384xi32>
    %c3_i32 = arith.constant 3 : i32
    %11 = vector.broadcast %c3_i32 : i32 to vector<6x384xi32>
    %12 = arith.cmpi eq, %8, %11 : vector<6x384xi32>
    %13 = arith.ori %10, %12 : vector<6x384xi1>
    %14 = arith.negf %3 : vector<6x384xf32>
    %15 = math.exp %14 : vector<6x384xf32>
    %cst = arith.constant 1.000000e+00 : f32
    %16 = vector.broadcast %cst : f32 to vector<6x384xf32>
    %17 = arith.addf %16, %15 : vector<6x384xf32>
    %18 = arith.divf %16, %17 : vector<6x384xf32>
    %19 = math.log %18 : vector<6x384xf32>
    %cst_8 = arith.constant -1.000000e+02 : f32
    %20 = vector.broadcast %cst_8 : f32 to vector<6x384xf32>
    %21 = arith.maximumf %19, %20 : vector<6x384xf32>
    %cst_9 = arith.constant 1.000000e+00 : f32
    %22 = vector.broadcast %cst_9 : f32 to vector<6x384xf32>
    %23 = arith.subf %22, %18 : vector<6x384xf32>
    %24 = math.log %23 : vector<6x384xf32>
    %cst_10 = arith.constant -1.000000e+02 : f32
    %25 = vector.broadcast %cst_10 : f32 to vector<6x384xf32>
    %26 = arith.maximumf %24, %25 : vector<6x384xf32>
    %27 = arith.mulf %4, %21 : vector<6x384xf32>
    %cst_11 = arith.constant 1.000000e+00 : f32
    %28 = vector.broadcast %cst_11 : f32 to vector<6x384xf32>
    %29 = arith.subf %28, %4 : vector<6x384xf32>
    %30 = arith.mulf %29, %26 : vector<6x384xf32>
    %31 = arith.addf %27, %30 : vector<6x384xf32>
    %cst_12 = arith.constant 0.000000e+00 : f32
    %32 = vector.broadcast %cst_12 : f32 to vector<6x384xf32>
    %33 = arith.subf %32, %31 : vector<6x384xf32>
    %34 = arith.subf %18, %4 : vector<6x384xf32>
    %35 = arith.subf %18, %4 : vector<6x384xf32>
    %36 = arith.mulf %34, %35 : vector<6x384xf32>
    %37 = arith.mulf %7, %7 : vector<1x384xf32>
    %38 = arith.subf %3, %4 : vector<6x384xf32>
    %39 = arith.subf %3, %4 : vector<6x384xf32>
    %40 = arith.mulf %38, %39 : vector<6x384xf32>
    %41 = vector.broadcast %37 : vector<1x384xf32> to vector<6x384xf32>
    %42 = arith.mulf %41, %40 : vector<6x384xf32>
    %c4_i32 = arith.constant 4 : i32
    %43 = vector.broadcast %c4_i32 : i32 to vector<6x384xi32>
    %44 = arith.cmpi eq, %8, %43 : vector<6x384xi32>
    %45 = vector.shape_cast %5 : vector<1x384xf32> to vector<1x384xf32>
    %46 = vector.broadcast %45 : vector<1x384xf32> to vector<6x384xf32>
    %47 = vector.shape_cast %6 : vector<1x384xf32> to vector<1x384xf32>
    %48 = vector.broadcast %47 : vector<1x384xf32> to vector<6x384xf32>
    %49 = arith.select %44, %46, %48 : vector<6x384xi1>, vector<6x384xf32>
    %cst_13 = arith.constant 0.000000e+00 : f32
    %50 = vector.broadcast %cst_13 : f32 to vector<6x384xf32>
    %c2_i32_14 = arith.constant 2 : i32
    %51 = vector.broadcast %c2_i32_14 : i32 to vector<6x384xi32>
    %52 = arith.cmpi slt, %8, %51 : vector<6x384xi32>
    %53 = arith.mulf %7, %7 : vector<1x384xf32>
    %54 = arith.mulf %6, %53 : vector<1x384xf32>
    %55 = vector.broadcast %54 : vector<1x384xf32> to vector<6x384xf32>
    %56 = arith.mulf %55, %33 : vector<6x384xf32>
    %57 = arith.select %52, %56, %50 : vector<6x384xi1>, vector<6x384xf32>
    %58 = vector.broadcast %6 : vector<1x384xf32> to vector<6x384xf32>
    %59 = arith.mulf %58, %42 : vector<6x384xf32>
    %60 = arith.select %13, %59, %50 : vector<6x384xi1>, vector<6x384xf32>
    %c4_i32_15 = arith.constant 4 : i32
    %61 = vector.broadcast %c4_i32_15 : i32 to vector<6x384xi32>
    %62 = arith.cmpi eq, %8, %61 : vector<6x384xi32>
    %63 = vector.broadcast %5 : vector<1x384xf32> to vector<6x384xf32>
    %64 = arith.mulf %63, %33 : vector<6x384xf32>
    %65 = arith.select %62, %64, %50 : vector<6x384xi1>, vector<6x384xf32>
    %c5_i32 = arith.constant 5 : i32
    %66 = vector.broadcast %c5_i32 : i32 to vector<6x384xi32>
    %67 = arith.cmpi sge, %8, %66 : vector<6x384xi32>
    %68 = vector.broadcast %6 : vector<1x384xf32> to vector<6x384xf32>
    %69 = arith.mulf %68, %33 : vector<6x384xf32>
    %70 = arith.select %67, %69, %50 : vector<6x384xi1>, vector<6x384xf32>
    %71 = vector.broadcast %6 : vector<1x384xf32> to vector<6x384xf32>
    %72 = arith.mulf %71, %42 : vector<6x384xf32>
    %73 = arith.mulf %49, %36 : vector<6x384xf32>
    %74 = arith.select %13, %72, %73 : vector<6x384xi1>, vector<6x384xf32>
    %c0_16 = arith.constant 0 : index
    %75 = memref.load %arg5[%c0_16] : memref<5xf32, #tpu.memory_space<smem>>
    %76 = vector.shape_cast %57 : vector<6x384xf32> to vector<1x6x384xf32>
    %cst_17 = arith.constant dense<0.000000e+00> : vector<1xf32>
    %77 = vector.multi_reduction <add>, %76, %cst_17 [1, 2] : vector<1x6x384xf32> to vector<1xf32>
    %78 = vector.shape_cast %77 : vector<1xf32> to vector<1x1x1xf32>
    %79 = vector.extract %78[0, 0, 0] : f32 from vector<1x1x1xf32>
    %80 = arith.addf %75, %79 : f32
    %c0_18 = arith.constant 0 : index
    %81 = memref.load %arg5[%c0_18] : memref<5xf32, #tpu.memory_space<smem>>
    memref.store %80, %arg5[%c0_18] : memref<5xf32, #tpu.memory_space<smem>>
    %c1_19 = arith.constant 1 : index
    %82 = memref.load %arg5[%c1_19] : memref<5xf32, #tpu.memory_space<smem>>
    %83 = vector.shape_cast %60 : vector<6x384xf32> to vector<1x6x384xf32>
    %cst_20 = arith.constant dense<0.000000e+00> : vector<1xf32>
    %84 = vector.multi_reduction <add>, %83, %cst_20 [1, 2] : vector<1x6x384xf32> to vector<1xf32>
    %85 = vector.shape_cast %84 : vector<1xf32> to vector<1x1x1xf32>
    %86 = vector.extract %85[0, 0, 0] : f32 from vector<1x1x1xf32>
    %cst_21 = arith.constant 5.000000e-01 : f32
    %87 = arith.mulf %cst_21, %86 : f32
    %88 = arith.addf %82, %87 : f32
    %c1_22 = arith.constant 1 : index
    %89 = memref.load %arg5[%c1_22] : memref<5xf32, #tpu.memory_space<smem>>
    memref.store %88, %arg5[%c1_22] : memref<5xf32, #tpu.memory_space<smem>>
    %c2_23 = arith.constant 2 : index
    %90 = memref.load %arg5[%c2_23] : memref<5xf32, #tpu.memory_space<smem>>
    %91 = vector.shape_cast %65 : vector<6x384xf32> to vector<1x6x384xf32>
    %cst_24 = arith.constant dense<0.000000e+00> : vector<1xf32>
    %92 = vector.multi_reduction <add>, %91, %cst_24 [1, 2] : vector<1x6x384xf32> to vector<1xf32>
    %93 = vector.shape_cast %92 : vector<1xf32> to vector<1x1x1xf32>
    %94 = vector.extract %93[0, 0, 0] : f32 from vector<1x1x1xf32>
    %95 = arith.addf %90, %94 : f32
    %c2_25 = arith.constant 2 : index
    %96 = memref.load %arg5[%c2_25] : memref<5xf32, #tpu.memory_space<smem>>
    memref.store %95, %arg5[%c2_25] : memref<5xf32, #tpu.memory_space<smem>>
    %c3 = arith.constant 3 : index
    %97 = memref.load %arg5[%c3] : memref<5xf32, #tpu.memory_space<smem>>
    %98 = vector.shape_cast %70 : vector<6x384xf32> to vector<1x6x384xf32>
    %cst_26 = arith.constant dense<0.000000e+00> : vector<1xf32>
    %99 = vector.multi_reduction <add>, %98, %cst_26 [1, 2] : vector<1x6x384xf32> to vector<1xf32>
    %100 = vector.shape_cast %99 : vector<1xf32> to vector<1x1x1xf32>
    %101 = vector.extract %100[0, 0, 0] : f32 from vector<1x1x1xf32>
    %102 = arith.addf %97, %101 : f32
    %c3_27 = arith.constant 3 : index
    %103 = memref.load %arg5[%c3_27] : memref<5xf32, #tpu.memory_space<smem>>
    memref.store %102, %arg5[%c3_27] : memref<5xf32, #tpu.memory_space<smem>>
    %c4 = arith.constant 4 : index
    %104 = memref.load %arg5[%c4] : memref<5xf32, #tpu.memory_space<smem>>
    %105 = vector.shape_cast %74 : vector<6x384xf32> to vector<1x6x384xf32>
    %cst_28 = arith.constant dense<0.000000e+00> : vector<1xf32>
    %106 = vector.multi_reduction <add>, %105, %cst_28 [1, 2] : vector<1x6x384xf32> to vector<1xf32>
    %107 = vector.shape_cast %106 : vector<1xf32> to vector<1x1x1xf32>
    %108 = vector.extract %107[0, 0, 0] : f32 from vector<1x1x1xf32>
    %109 = arith.addf %104, %108 : f32
    %c4_29 = arith.constant 4 : index
    %110 = memref.load %arg5[%c4_29] : memref<5xf32, #tpu.memory_space<smem>>
    memref.store %109, %arg5[%c4_29] : memref<5xf32, #tpu.memory_space<smem>>
    %c0_i32_30 = arith.constant 0 : i32
    %111 = arith.cmpi eq, %arg0, %c0_i32_30 : i32
    %112 = arith.extui %111 : i1 to i32
    %c0_i32_31 = arith.constant 0 : i32
    %113 = arith.cmpi ne, %112, %c0_i32_31 : i32
    scf.if %113 {
      %c0_32 = arith.constant 0 : index
      %114 = memref.load %arg5[%c0_32] : memref<5xf32, #tpu.memory_space<smem>>
      %c0_33 = arith.constant 0 : index
      %115 = memref.load %arg4[%c0_33] : memref<5xf32, #tpu.memory_space<smem>>
      memref.store %114, %arg4[%c0_33] : memref<5xf32, #tpu.memory_space<smem>>
      %c1_34 = arith.constant 1 : index
      %116 = memref.load %arg5[%c1_34] : memref<5xf32, #tpu.memory_space<smem>>
      %c1_35 = arith.constant 1 : index
      %117 = memref.load %arg4[%c1_35] : memref<5xf32, #tpu.memory_space<smem>>
      memref.store %116, %arg4[%c1_35] : memref<5xf32, #tpu.memory_space<smem>>
      %c2_36 = arith.constant 2 : index
      %118 = memref.load %arg5[%c2_36] : memref<5xf32, #tpu.memory_space<smem>>
      %c2_37 = arith.constant 2 : index
      %119 = memref.load %arg4[%c2_37] : memref<5xf32, #tpu.memory_space<smem>>
      memref.store %118, %arg4[%c2_37] : memref<5xf32, #tpu.memory_space<smem>>
      %c3_38 = arith.constant 3 : index
      %120 = memref.load %arg5[%c3_38] : memref<5xf32, #tpu.memory_space<smem>>
      %c3_39 = arith.constant 3 : index
      %121 = memref.load %arg4[%c3_39] : memref<5xf32, #tpu.memory_space<smem>>
      memref.store %120, %arg4[%c3_39] : memref<5xf32, #tpu.memory_space<smem>>
      %c4_40 = arith.constant 4 : index
      %122 = memref.load %arg5[%c4_40] : memref<5xf32, #tpu.memory_space<smem>>
      %c4_41 = arith.constant 4 : index
      %123 = memref.load %arg4[%c4_41] : memref<5xf32, #tpu.memory_space<smem>>
      memref.store %122, %arg4[%c4_41] : memref<5xf32, #tpu.memory_space<smem>>
    } else {
    }
    return
  }
  func.func @transform_0(%arg0: i32) -> (i32, i32) {
    %c0_i32 = arith.constant 0 : i32
    %c0_i32_0 = arith.constant 0 : i32
    return %c0_i32, %arg0 : i32, i32
  }
  func.func @transform_1(%arg0: i32) -> (i32, i32) {
    %c0_i32 = arith.constant 0 : i32
    %c0_i32_0 = arith.constant 0 : i32
    return %c0_i32, %arg0 : i32, i32
  }
  func.func @transform_2(%arg0: i32) -> (i32, i32) {
    %c0_i32 = arith.constant 0 : i32
    %c0_i32_0 = arith.constant 0 : i32
    return %c0_i32, %arg0 : i32, i32
  }
  func.func @transform_3(%arg0: i32) -> i32 {
    %c0_i32 = arith.constant 0 : i32
    %c0_i32_0 = arith.constant 0 : i32
    return %c0_i32 : i32
  }
}

module attributes {stable_mosaic.version = 11 : i64} {
  func.func @_decode_kernel(%arg0: i32, %arg1: memref<6x1536xf32, #tpu.memory_space<vmem>>, %arg2: memref<1x1536xi32, #tpu.memory_space<vmem>>, %arg3: memref<4x1536xf32, #tpu.memory_space<vmem>>) attributes {dimension_semantics = [#tpu.dimension_semantics<parallel>], iteration_bounds = array<i64: 1>, scalar_prefetch = 0 : i64, scratch_operands = 0 : i64, tpu.core_type = #tpu.core_type<tc>, window_params = [{transform_indices = @transform_0, window_bounds = array<i64: 6, 1536>}, {transform_indices = @transform_1, window_bounds = array<i64: 1, 1536>}, {transform_indices = @transform_2, window_bounds = array<i64: 4, 1536>}]} {
    %c0 = arith.constant 0 : index
    %c0_0 = arith.constant 0 : index
    %0 = vector.load %arg2[%c0, %c0_0] : memref<1x1536xi32, #tpu.memory_space<vmem>>, vector<1x1536xi32>
    %c127_i32 = arith.constant 127 : i32
    %1 = vector.broadcast %c127_i32 : i32 to vector<1x1536xi32>
    %2 = arith.andi %0, %1 : vector<1x1536xi32>
    %3 = arith.sitofp %2 : vector<1x1536xi32> to vector<1x1536xf32>
    %c7_i32 = arith.constant 7 : i32
    %4 = vector.broadcast %c7_i32 : i32 to vector<1x1536xi32>
    %5 = arith.shrsi %0, %4 : vector<1x1536xi32>
    %c127_i32_1 = arith.constant 127 : i32
    %6 = vector.broadcast %c127_i32_1 : i32 to vector<1x1536xi32>
    %7 = arith.andi %5, %6 : vector<1x1536xi32>
    %8 = arith.sitofp %7 : vector<1x1536xi32> to vector<1x1536xf32>
    %c14_i32 = arith.constant 14 : i32
    %9 = vector.broadcast %c14_i32 : i32 to vector<1x1536xi32>
    %10 = arith.shrsi %0, %9 : vector<1x1536xi32>
    %c0_i32 = arith.constant 0 : i32
    %11 = vector.broadcast %c0_i32 : i32 to vector<1x1536xi32>
    %12 = arith.cmpi eq, %10, %11 : vector<1x1536xi32>
    %c1_i32 = arith.constant 1 : i32
    %13 = vector.broadcast %c1_i32 : i32 to vector<1x1536xi32>
    %14 = arith.cmpi eq, %10, %13 : vector<1x1536xi32>
    %cst = arith.constant 2.375000e+00 : f32
    %cst_2 = arith.constant 5.000000e+00 : f32
    %15 = vector.broadcast %cst : f32 to vector<1x1536xf32>
    %16 = vector.broadcast %cst_2 : f32 to vector<1x1536xf32>
    %17 = arith.select %14, %15, %16 : vector<1x1536xi1>, vector<1x1536xf32>
    %cst_3 = arith.constant 1.500000e+00 : f32
    %18 = vector.broadcast %cst_3 : f32 to vector<1x1536xf32>
    %19 = arith.select %12, %18, %17 : vector<1x1536xi1>, vector<1x1536xf32>
    %c0_i32_4 = arith.constant 0 : i32
    %20 = vector.broadcast %c0_i32_4 : i32 to vector<1x1536xi32>
    %21 = arith.cmpi eq, %10, %20 : vector<1x1536xi32>
    %c1_i32_5 = arith.constant 1 : i32
    %22 = vector.broadcast %c1_i32_5 : i32 to vector<1x1536xi32>
    %23 = arith.cmpi eq, %10, %22 : vector<1x1536xi32>
    %cst_6 = arith.constant 4.500000e+00 : f32
    %cst_7 = arith.constant 3.500000e+00 : f32
    %24 = vector.broadcast %cst_6 : f32 to vector<1x1536xf32>
    %25 = vector.broadcast %cst_7 : f32 to vector<1x1536xf32>
    %26 = arith.select %23, %24, %25 : vector<1x1536xi1>, vector<1x1536xf32>
    %cst_8 = arith.constant 2.000000e+00 : f32
    %27 = vector.broadcast %cst_8 : f32 to vector<1x1536xf32>
    %28 = arith.select %21, %27, %26 : vector<1x1536xi1>, vector<1x1536xf32>
    %c0_9 = arith.constant 0 : index
    %c0_10 = arith.constant 0 : index
    %29 = vector.load %arg1[%c0_9, %c0_10] : memref<6x1536xf32, #tpu.memory_space<vmem>>, vector<1x1536xf32>
    %30 = arith.negf %29 : vector<1x1536xf32>
    %31 = math.exp %30 : vector<1x1536xf32>
    %cst_11 = arith.constant 1.000000e+00 : f32
    %32 = vector.broadcast %cst_11 : f32 to vector<1x1536xf32>
    %33 = arith.addf %32, %31 : vector<1x1536xf32>
    %34 = arith.divf %32, %33 : vector<1x1536xf32>
    %35 = arith.addf %34, %3 : vector<1x1536xf32>
    %c0_12 = arith.constant 0 : index
    %c0_13 = arith.constant 0 : index
    %36 = vector.load %arg3[%c0_12, %c0_13] : memref<4x1536xf32, #tpu.memory_space<vmem>>, vector<1x1536xf32>
    tpu.vector_store %arg3[%c0_12, %c0_13], %35 {strides = array<i32>} : memref<4x1536xf32, #tpu.memory_space<vmem>>, vector<1x1536xf32>,
    %c1 = arith.constant 1 : index
    %c0_14 = arith.constant 0 : index
    %37 = vector.load %arg1[%c1, %c0_14] : memref<6x1536xf32, #tpu.memory_space<vmem>>, vector<1x1536xf32>
    %38 = arith.negf %37 : vector<1x1536xf32>
    %39 = math.exp %38 : vector<1x1536xf32>
    %cst_15 = arith.constant 1.000000e+00 : f32
    %40 = vector.broadcast %cst_15 : f32 to vector<1x1536xf32>
    %41 = arith.addf %40, %39 : vector<1x1536xf32>
    %42 = arith.divf %40, %41 : vector<1x1536xf32>
    %43 = arith.addf %42, %8 : vector<1x1536xf32>
    %c1_16 = arith.constant 1 : index
    %c0_17 = arith.constant 0 : index
    %44 = vector.load %arg3[%c1_16, %c0_17] : memref<4x1536xf32, #tpu.memory_space<vmem>>, vector<1x1536xf32>
    tpu.vector_store %arg3[%c1_16, %c0_17], %43 {strides = array<i32>} : memref<4x1536xf32, #tpu.memory_space<vmem>>, vector<1x1536xf32>,
    %c2 = arith.constant 2 : index
    %c0_18 = arith.constant 0 : index
    %45 = vector.load %arg1[%c2, %c0_18] : memref<6x1536xf32, #tpu.memory_space<vmem>>, vector<1x1536xf32>
    %46 = math.exp %45 : vector<1x1536xf32>
    %47 = arith.mulf %46, %19 : vector<1x1536xf32>
    %c2_19 = arith.constant 2 : index
    %c0_20 = arith.constant 0 : index
    %48 = vector.load %arg3[%c2_19, %c0_20] : memref<4x1536xf32, #tpu.memory_space<vmem>>, vector<1x1536xf32>
    tpu.vector_store %arg3[%c2_19, %c0_20], %47 {strides = array<i32>} : memref<4x1536xf32, #tpu.memory_space<vmem>>, vector<1x1536xf32>,
    %c3 = arith.constant 3 : index
    %c0_21 = arith.constant 0 : index
    %49 = vector.load %arg1[%c3, %c0_21] : memref<6x1536xf32, #tpu.memory_space<vmem>>, vector<1x1536xf32>
    %50 = math.exp %49 : vector<1x1536xf32>
    %51 = arith.mulf %50, %28 : vector<1x1536xf32>
    %c3_22 = arith.constant 3 : index
    %c0_23 = arith.constant 0 : index
    %52 = vector.load %arg3[%c3_22, %c0_23] : memref<4x1536xf32, #tpu.memory_space<vmem>>, vector<1x1536xf32>
    tpu.vector_store %arg3[%c3_22, %c0_23], %51 {strides = array<i32>} : memref<4x1536xf32, #tpu.memory_space<vmem>>, vector<1x1536xf32>,
    return
  }
  func.func @transform_0(%arg0: i32) -> (i32, i32) {
    %c0_i32 = arith.constant 0 : i32
    %c0_i32_0 = arith.constant 0 : i32
    return %c0_i32, %arg0 : i32, i32
  }
  func.func @transform_1(%arg0: i32) -> (i32, i32) {
    %c0_i32 = arith.constant 0 : i32
    %c0_i32_0 = arith.constant 0 : i32
    return %c0_i32, %arg0 : i32, i32
  }
  func.func @transform_2(%arg0: i32) -> (i32, i32) {
    %c0_i32 = arith.constant 0 : i32
    %c0_i32_0 = arith.constant 0 : i32
    return %c0_i32, %arg0 : i32, i32
  }
}

module attributes {stable_mosaic.version = 11 : i64} {
  func.func @_loss_kernel(%arg0: i32, %arg1: memref<6x1536xf32, #tpu.memory_space<vmem>>, %arg2: memref<6x1536xf32, #tpu.memory_space<vmem>>, %arg3: memref<3x1536xf32, #tpu.memory_space<vmem>>, %arg4: memref<5xf32, #tpu.memory_space<smem>>, %arg5: memref<5xf32, #tpu.memory_space<smem>>) attributes {dimension_semantics = [#tpu.dimension_semantics<arbitrary>], iteration_bounds = array<i64: 1>, scalar_prefetch = 0 : i64, scratch_operands = 1 : i64, tpu.core_type = #tpu.core_type<tc>, window_params = [{transform_indices = @transform_0, window_bounds = array<i64: 6, 1536>}, {transform_indices = @transform_1, window_bounds = array<i64: 6, 1536>}, {transform_indices = @transform_2, window_bounds = array<i64: 3, 1536>}, {transform_indices = @transform_3, window_bounds = array<i64: 5>}]} {
    %c0_i32 = arith.constant 0 : i32
    %0 = arith.cmpi eq, %arg0, %c0_i32 : i32
    %1 = arith.extui %0 : i1 to i32
    %c0_i32_0 = arith.constant 0 : i32
    %2 = arith.cmpi ne, %1, %c0_i32_0 : i32
    scf.if %2 {
      %cst_32 = arith.constant 0.000000e+00 : f32
      %c0_33 = arith.constant 0 : index
      %114 = memref.load %arg5[%c0_33] : memref<5xf32, #tpu.memory_space<smem>>
      memref.store %cst_32, %arg5[%c0_33] : memref<5xf32, #tpu.memory_space<smem>>
      %cst_34 = arith.constant 0.000000e+00 : f32
      %c1_35 = arith.constant 1 : index
      %115 = memref.load %arg5[%c1_35] : memref<5xf32, #tpu.memory_space<smem>>
      memref.store %cst_34, %arg5[%c1_35] : memref<5xf32, #tpu.memory_space<smem>>
      %cst_36 = arith.constant 0.000000e+00 : f32
      %c2_37 = arith.constant 2 : index
      %116 = memref.load %arg5[%c2_37] : memref<5xf32, #tpu.memory_space<smem>>
      memref.store %cst_36, %arg5[%c2_37] : memref<5xf32, #tpu.memory_space<smem>>
      %cst_38 = arith.constant 0.000000e+00 : f32
      %c3_39 = arith.constant 3 : index
      %117 = memref.load %arg5[%c3_39] : memref<5xf32, #tpu.memory_space<smem>>
      memref.store %cst_38, %arg5[%c3_39] : memref<5xf32, #tpu.memory_space<smem>>
      %cst_40 = arith.constant 0.000000e+00 : f32
      %c4_41 = arith.constant 4 : index
      %118 = memref.load %arg5[%c4_41] : memref<5xf32, #tpu.memory_space<smem>>
      memref.store %cst_40, %arg5[%c4_41] : memref<5xf32, #tpu.memory_space<smem>>
    } else {
    }
    %c0 = arith.constant 0 : index
    %c0_1 = arith.constant 0 : index
    %3 = vector.load %arg1[%c0, %c0_1] : memref<6x1536xf32, #tpu.memory_space<vmem>>, vector<6x1536xf32>
    %c0_2 = arith.constant 0 : index
    %c0_3 = arith.constant 0 : index
    %4 = vector.load %arg2[%c0_2, %c0_3] : memref<6x1536xf32, #tpu.memory_space<vmem>>, vector<6x1536xf32>
    %c0_4 = arith.constant 0 : index
    %c0_5 = arith.constant 0 : index
    %5 = vector.load %arg3[%c0_4, %c0_5] : memref<3x1536xf32, #tpu.memory_space<vmem>>, vector<1x1536xf32>
    %c1 = arith.constant 1 : index
    %c0_6 = arith.constant 0 : index
    %6 = vector.load %arg3[%c1, %c0_6] : memref<3x1536xf32, #tpu.memory_space<vmem>>, vector<1x1536xf32>
    %c2 = arith.constant 2 : index
    %c0_7 = arith.constant 0 : index
    %7 = vector.load %arg3[%c2, %c0_7] : memref<3x1536xf32, #tpu.memory_space<vmem>>, vector<1x1536xf32>
    %8 = tpu.iota {dimensions = array<i32: 0>} : vector<6x1536xi32>
    %c2_i32 = arith.constant 2 : i32
    %9 = vector.broadcast %c2_i32 : i32 to vector<6x1536xi32>
    %10 = arith.cmpi eq, %8, %9 : vector<6x1536xi32>
    %c3_i32 = arith.constant 3 : i32
    %11 = vector.broadcast %c3_i32 : i32 to vector<6x1536xi32>
    %12 = arith.cmpi eq, %8, %11 : vector<6x1536xi32>
    %13 = arith.ori %10, %12 : vector<6x1536xi1>
    %14 = arith.negf %3 : vector<6x1536xf32>
    %15 = math.exp %14 : vector<6x1536xf32>
    %cst = arith.constant 1.000000e+00 : f32
    %16 = vector.broadcast %cst : f32 to vector<6x1536xf32>
    %17 = arith.addf %16, %15 : vector<6x1536xf32>
    %18 = arith.divf %16, %17 : vector<6x1536xf32>
    %19 = math.log %18 : vector<6x1536xf32>
    %cst_8 = arith.constant -1.000000e+02 : f32
    %20 = vector.broadcast %cst_8 : f32 to vector<6x1536xf32>
    %21 = arith.maximumf %19, %20 : vector<6x1536xf32>
    %cst_9 = arith.constant 1.000000e+00 : f32
    %22 = vector.broadcast %cst_9 : f32 to vector<6x1536xf32>
    %23 = arith.subf %22, %18 : vector<6x1536xf32>
    %24 = math.log %23 : vector<6x1536xf32>
    %cst_10 = arith.constant -1.000000e+02 : f32
    %25 = vector.broadcast %cst_10 : f32 to vector<6x1536xf32>
    %26 = arith.maximumf %24, %25 : vector<6x1536xf32>
    %27 = arith.mulf %4, %21 : vector<6x1536xf32>
    %cst_11 = arith.constant 1.000000e+00 : f32
    %28 = vector.broadcast %cst_11 : f32 to vector<6x1536xf32>
    %29 = arith.subf %28, %4 : vector<6x1536xf32>
    %30 = arith.mulf %29, %26 : vector<6x1536xf32>
    %31 = arith.addf %27, %30 : vector<6x1536xf32>
    %cst_12 = arith.constant 0.000000e+00 : f32
    %32 = vector.broadcast %cst_12 : f32 to vector<6x1536xf32>
    %33 = arith.subf %32, %31 : vector<6x1536xf32>
    %34 = arith.subf %18, %4 : vector<6x1536xf32>
    %35 = arith.subf %18, %4 : vector<6x1536xf32>
    %36 = arith.mulf %34, %35 : vector<6x1536xf32>
    %37 = arith.mulf %7, %7 : vector<1x1536xf32>
    %38 = arith.subf %3, %4 : vector<6x1536xf32>
    %39 = arith.subf %3, %4 : vector<6x1536xf32>
    %40 = arith.mulf %38, %39 : vector<6x1536xf32>
    %41 = vector.broadcast %37 : vector<1x1536xf32> to vector<6x1536xf32>
    %42 = arith.mulf %41, %40 : vector<6x1536xf32>
    %c4_i32 = arith.constant 4 : i32
    %43 = vector.broadcast %c4_i32 : i32 to vector<6x1536xi32>
    %44 = arith.cmpi eq, %8, %43 : vector<6x1536xi32>
    %45 = vector.shape_cast %5 : vector<1x1536xf32> to vector<1x1536xf32>
    %46 = vector.broadcast %45 : vector<1x1536xf32> to vector<6x1536xf32>
    %47 = vector.shape_cast %6 : vector<1x1536xf32> to vector<1x1536xf32>
    %48 = vector.broadcast %47 : vector<1x1536xf32> to vector<6x1536xf32>
    %49 = arith.select %44, %46, %48 : vector<6x1536xi1>, vector<6x1536xf32>
    %cst_13 = arith.constant 0.000000e+00 : f32
    %50 = vector.broadcast %cst_13 : f32 to vector<6x1536xf32>
    %c2_i32_14 = arith.constant 2 : i32
    %51 = vector.broadcast %c2_i32_14 : i32 to vector<6x1536xi32>
    %52 = arith.cmpi slt, %8, %51 : vector<6x1536xi32>
    %53 = arith.mulf %7, %7 : vector<1x1536xf32>
    %54 = arith.mulf %6, %53 : vector<1x1536xf32>
    %55 = vector.broadcast %54 : vector<1x1536xf32> to vector<6x1536xf32>
    %56 = arith.mulf %55, %33 : vector<6x1536xf32>
    %57 = arith.select %52, %56, %50 : vector<6x1536xi1>, vector<6x1536xf32>
    %58 = vector.broadcast %6 : vector<1x1536xf32> to vector<6x1536xf32>
    %59 = arith.mulf %58, %42 : vector<6x1536xf32>
    %60 = arith.select %13, %59, %50 : vector<6x1536xi1>, vector<6x1536xf32>
    %c4_i32_15 = arith.constant 4 : i32
    %61 = vector.broadcast %c4_i32_15 : i32 to vector<6x1536xi32>
    %62 = arith.cmpi eq, %8, %61 : vector<6x1536xi32>
    %63 = vector.broadcast %5 : vector<1x1536xf32> to vector<6x1536xf32>
    %64 = arith.mulf %63, %33 : vector<6x1536xf32>
    %65 = arith.select %62, %64, %50 : vector<6x1536xi1>, vector<6x1536xf32>
    %c5_i32 = arith.constant 5 : i32
    %66 = vector.broadcast %c5_i32 : i32 to vector<6x1536xi32>
    %67 = arith.cmpi sge, %8, %66 : vector<6x1536xi32>
    %68 = vector.broadcast %6 : vector<1x1536xf32> to vector<6x1536xf32>
    %69 = arith.mulf %68, %33 : vector<6x1536xf32>
    %70 = arith.select %67, %69, %50 : vector<6x1536xi1>, vector<6x1536xf32>
    %71 = vector.broadcast %6 : vector<1x1536xf32> to vector<6x1536xf32>
    %72 = arith.mulf %71, %42 : vector<6x1536xf32>
    %73 = arith.mulf %49, %36 : vector<6x1536xf32>
    %74 = arith.select %13, %72, %73 : vector<6x1536xi1>, vector<6x1536xf32>
    %c0_16 = arith.constant 0 : index
    %75 = memref.load %arg5[%c0_16] : memref<5xf32, #tpu.memory_space<smem>>
    %76 = vector.shape_cast %57 : vector<6x1536xf32> to vector<1x6x1536xf32>
    %cst_17 = arith.constant dense<0.000000e+00> : vector<1xf32>
    %77 = vector.multi_reduction <add>, %76, %cst_17 [1, 2] : vector<1x6x1536xf32> to vector<1xf32>
    %78 = vector.shape_cast %77 : vector<1xf32> to vector<1x1x1xf32>
    %79 = vector.extract %78[0, 0, 0] : f32 from vector<1x1x1xf32>
    %80 = arith.addf %75, %79 : f32
    %c0_18 = arith.constant 0 : index
    %81 = memref.load %arg5[%c0_18] : memref<5xf32, #tpu.memory_space<smem>>
    memref.store %80, %arg5[%c0_18] : memref<5xf32, #tpu.memory_space<smem>>
    %c1_19 = arith.constant 1 : index
    %82 = memref.load %arg5[%c1_19] : memref<5xf32, #tpu.memory_space<smem>>
    %83 = vector.shape_cast %60 : vector<6x1536xf32> to vector<1x6x1536xf32>
    %cst_20 = arith.constant dense<0.000000e+00> : vector<1xf32>
    %84 = vector.multi_reduction <add>, %83, %cst_20 [1, 2] : vector<1x6x1536xf32> to vector<1xf32>
    %85 = vector.shape_cast %84 : vector<1xf32> to vector<1x1x1xf32>
    %86 = vector.extract %85[0, 0, 0] : f32 from vector<1x1x1xf32>
    %cst_21 = arith.constant 5.000000e-01 : f32
    %87 = arith.mulf %cst_21, %86 : f32
    %88 = arith.addf %82, %87 : f32
    %c1_22 = arith.constant 1 : index
    %89 = memref.load %arg5[%c1_22] : memref<5xf32, #tpu.memory_space<smem>>
    memref.store %88, %arg5[%c1_22] : memref<5xf32, #tpu.memory_space<smem>>
    %c2_23 = arith.constant 2 : index
    %90 = memref.load %arg5[%c2_23] : memref<5xf32, #tpu.memory_space<smem>>
    %91 = vector.shape_cast %65 : vector<6x1536xf32> to vector<1x6x1536xf32>
    %cst_24 = arith.constant dense<0.000000e+00> : vector<1xf32>
    %92 = vector.multi_reduction <add>, %91, %cst_24 [1, 2] : vector<1x6x1536xf32> to vector<1xf32>
    %93 = vector.shape_cast %92 : vector<1xf32> to vector<1x1x1xf32>
    %94 = vector.extract %93[0, 0, 0] : f32 from vector<1x1x1xf32>
    %95 = arith.addf %90, %94 : f32
    %c2_25 = arith.constant 2 : index
    %96 = memref.load %arg5[%c2_25] : memref<5xf32, #tpu.memory_space<smem>>
    memref.store %95, %arg5[%c2_25] : memref<5xf32, #tpu.memory_space<smem>>
    %c3 = arith.constant 3 : index
    %97 = memref.load %arg5[%c3] : memref<5xf32, #tpu.memory_space<smem>>
    %98 = vector.shape_cast %70 : vector<6x1536xf32> to vector<1x6x1536xf32>
    %cst_26 = arith.constant dense<0.000000e+00> : vector<1xf32>
    %99 = vector.multi_reduction <add>, %98, %cst_26 [1, 2] : vector<1x6x1536xf32> to vector<1xf32>
    %100 = vector.shape_cast %99 : vector<1xf32> to vector<1x1x1xf32>
    %101 = vector.extract %100[0, 0, 0] : f32 from vector<1x1x1xf32>
    %102 = arith.addf %97, %101 : f32
    %c3_27 = arith.constant 3 : index
    %103 = memref.load %arg5[%c3_27] : memref<5xf32, #tpu.memory_space<smem>>
    memref.store %102, %arg5[%c3_27] : memref<5xf32, #tpu.memory_space<smem>>
    %c4 = arith.constant 4 : index
    %104 = memref.load %arg5[%c4] : memref<5xf32, #tpu.memory_space<smem>>
    %105 = vector.shape_cast %74 : vector<6x1536xf32> to vector<1x6x1536xf32>
    %cst_28 = arith.constant dense<0.000000e+00> : vector<1xf32>
    %106 = vector.multi_reduction <add>, %105, %cst_28 [1, 2] : vector<1x6x1536xf32> to vector<1xf32>
    %107 = vector.shape_cast %106 : vector<1xf32> to vector<1x1x1xf32>
    %108 = vector.extract %107[0, 0, 0] : f32 from vector<1x1x1xf32>
    %109 = arith.addf %104, %108 : f32
    %c4_29 = arith.constant 4 : index
    %110 = memref.load %arg5[%c4_29] : memref<5xf32, #tpu.memory_space<smem>>
    memref.store %109, %arg5[%c4_29] : memref<5xf32, #tpu.memory_space<smem>>
    %c0_i32_30 = arith.constant 0 : i32
    %111 = arith.cmpi eq, %arg0, %c0_i32_30 : i32
    %112 = arith.extui %111 : i1 to i32
    %c0_i32_31 = arith.constant 0 : i32
    %113 = arith.cmpi ne, %112, %c0_i32_31 : i32
    scf.if %113 {
      %c0_32 = arith.constant 0 : index
      %114 = memref.load %arg5[%c0_32] : memref<5xf32, #tpu.memory_space<smem>>
      %c0_33 = arith.constant 0 : index
      %115 = memref.load %arg4[%c0_33] : memref<5xf32, #tpu.memory_space<smem>>
      memref.store %114, %arg4[%c0_33] : memref<5xf32, #tpu.memory_space<smem>>
      %c1_34 = arith.constant 1 : index
      %116 = memref.load %arg5[%c1_34] : memref<5xf32, #tpu.memory_space<smem>>
      %c1_35 = arith.constant 1 : index
      %117 = memref.load %arg4[%c1_35] : memref<5xf32, #tpu.memory_space<smem>>
      memref.store %116, %arg4[%c1_35] : memref<5xf32, #tpu.memory_space<smem>>
      %c2_36 = arith.constant 2 : index
      %118 = memref.load %arg5[%c2_36] : memref<5xf32, #tpu.memory_space<smem>>
      %c2_37 = arith.constant 2 : index
      %119 = memref.load %arg4[%c2_37] : memref<5xf32, #tpu.memory_space<smem>>
      memref.store %118, %arg4[%c2_37] : memref<5xf32, #tpu.memory_space<smem>>
      %c3_38 = arith.constant 3 : index
      %120 = memref.load %arg5[%c3_38] : memref<5xf32, #tpu.memory_space<smem>>
      %c3_39 = arith.constant 3 : index
      %121 = memref.load %arg4[%c3_39] : memref<5xf32, #tpu.memory_space<smem>>
      memref.store %120, %arg4[%c3_39] : memref<5xf32, #tpu.memory_space<smem>>
      %c4_40 = arith.constant 4 : index
      %122 = memref.load %arg5[%c4_40] : memref<5xf32, #tpu.memory_space<smem>>
      %c4_41 = arith.constant 4 : index
      %123 = memref.load %arg4[%c4_41] : memref<5xf32, #tpu.memory_space<smem>>
      memref.store %122, %arg4[%c4_41] : memref<5xf32, #tpu.memory_space<smem>>
    } else {
    }
    return
  }
  func.func @transform_0(%arg0: i32) -> (i32, i32) {
    %c0_i32 = arith.constant 0 : i32
    %c0_i32_0 = arith.constant 0 : i32
    return %c0_i32, %arg0 : i32, i32
  }
  func.func @transform_1(%arg0: i32) -> (i32, i32) {
    %c0_i32 = arith.constant 0 : i32
    %c0_i32_0 = arith.constant 0 : i32
    return %c0_i32, %arg0 : i32, i32
  }
  func.func @transform_2(%arg0: i32) -> (i32, i32) {
    %c0_i32 = arith.constant 0 : i32
    %c0_i32_0 = arith.constant 0 : i32
    return %c0_i32, %arg0 : i32, i32
  }
  func.func @transform_3(%arg0: i32) -> i32 {
    %c0_i32 = arith.constant 0 : i32
    %c0_i32_0 = arith.constant 0 : i32
    return %c0_i32 : i32
  }
}

</mosaic_0001>

<llo_original>
// kernel: mul.130
$region0: #{mul.130}
  #allocation0 [shape = 's32[1]{0}', space=sflag, size = 0x4, scoped, tag = 'scoped memory for mul.130']
  %s0 = inlined_call_operand.vmem [shape: f32[2,4], index: 0, kind: input, shape index: {}]
  %s1 = inlined_call_operand.vmem [shape: f32[2,4], index: 1, kind: input, shape index: {}]
  %s2 = inlined_call_operand.vmem [shape: f32[2,4], index: 2, kind: output, shape index: {}]
  %v3 = vld [vmem:[%s0] sm:$0x3]
  %v4 = vld [vmem:[%s1] sm:$0x3]
  %5 = xla_tuple %v3, %v4
  %6 = xla_tuple %5
  %v7 = vmul.f32 %v3, %v4
  %8 = xla_tuple %v7
  %9 = vst [vmem:[%s2] sm:$0x3] %v7

// kernel: _forward_impl.10
$region0: #{_forward_impl.10}
  #allocation0 [shape = 'u32[]', space=smem, size = 0x4, offset = 0x4, fixed_abs, tag = 'smem constant byte address 0x4 - core index']
  #allocation1 [shape = 'u32[144,128]{1,0:T(1,128)}', space=vmem, size = 0x12000, scoped, tag = 'internal scratch']
  %s0 = inlined_call_operand.vmem [shape: f32[6,128], index: 0, kind: input, shape index: {}]
  %s1 = inlined_call_operand.vmem [shape: s32[1,128], index: 1, kind: input, shape index: {}]
  %s2 = inlined_call_operand.vmem [shape: f32[4,128], index: 2, kind: output, shape index: {}]
  %s3 = sld [smem:[#allocation0]]
  $region18: #{_forward_impl.10} parent=0
    _
  %s5 = ssub.s32 1, %s3
  %s6 = scalar_select 0, %s5, %s3
  // Predicated region
  $region2: #{_forward_impl.10} parent=0 // pred_check
    _
  $region3: #{_forward_impl.10} parent=0 // pred_check_branch
    %8 = sbr.rel (0) target = $region5
  $region4: #{_forward_impl.10} parent=0 // pred_region
    _
  $region5: #{_forward_impl.10} parent=0 // pred_fallthru
    _
  // Predicated region
  $region6: #{_forward_impl.10} parent=0 // pred_check
    _
  $region7: #{_forward_impl.10} parent=0 // pred_check_branch
    %10 = sbr.rel (0) target = $region9
  $region8: #{_forward_impl.10} parent=0 // pred_region
    _
  $region9: #{_forward_impl.10} parent=0 // pred_fallthru
    _
  %v11 = vld [vmem:[%s1] sm:$0x1]
  %v12 = vand.u32 %v11, 127
  %v13 = vcvt.s32.f32 %v12
  %v14 = vshra.s32 %v11, 7
  %v15 = vand.u32 %v14, 127
  %v16 = vcvt.s32.f32 %v15
  %v17 = vshra.s32 %v11, 14
  %vm18 = vcmp.eq.s32.totalorder %v17, 0
  %vm19 = vcmp.eq.s32.totalorder %v17, 1
  %v20 = vsel %vm19, 6.0, 14.34375
  %v21 = vsel %vm18, 4.4375, %v20
  %v22 = vsel %vm19, 7.59375, 12.53125
  %v23 = vsel %vm18, 3.4375, %v22
  %v24 = vld [vmem:[%s0] sm:$0x1]
  %v25 = vxor.u32 %v24, 2147483648
  %v26 = vmul.f32 %v25, 1.442695
  %v27 = vpow.pop %v26
  %v28 = vadd.f32 %v27, 1.0
  %v29 = vrcp.pop %v28
  %v30 = vmul.f32 1.0, %v29
  %v31 = vadd.f32 %v30, %v13
  %32 = vst [vmem:[%s2] sm:$0x1] %v31
  %v33 = vld [vmem:[%s0 + $0x1] sm:$0x1]
  %v34 = vxor.u32 %v33, 2147483648
  %v35 = vmul.f32 %v34, 1.442695
  %v36 = vpow.pop %v35
  %v37 = vadd.f32 %v36, 1.0
  %v38 = vrcp.pop %v37
  %v39 = vmul.f32 1.0, %v38
  %v40 = vadd.f32 %v39, %v16
  %41 = vst [vmem:[%s2 + $0x1] sm:$0x1] %v40
  %v42 = vld [vmem:[%s0 + $0x2] sm:$0x1]
  %v43 = vmul.f32 %v42, 1.442695
  %v44 = vpow.pop %v43
  %v45 = vmul.f32 %v44, %v21
  %46 = vst [vmem:[%s2 + $0x2] sm:$0x1] %v45
  %v47 = vld [vmem:[%s0 + $0x3] sm:$0x1]
  %v48 = vmul.f32 %v47, 1.442695
  %v49 = vpow.pop %v48
  %v50 = vmul.f32 %v49, %v23
  %51 = vst [vmem:[%s2 + $0x3] sm:$0x1] %v50
  // Predicated region
  $region10: #{_forward_impl.10} parent=0 // pred_check
    _
  $region11: #{_forward_impl.10} parent=0 // pred_check_branch
    %53 = sbr.rel (0) target = $region13
  $region12: #{_forward_impl.10} parent=0 // pred_region
    _
  $region13: #{_forward_impl.10} parent=0 // pred_fallthru
    _
  // Predicated region
  $region14: #{_forward_impl.10} parent=0 // pred_check
    _
  $region15: #{_forward_impl.10} parent=0 // pred_check_branch
    %55 = sbr.rel (0) target = $region17
  $region16: #{_forward_impl.10} parent=0 // pred_region
    _
  $region17: #{_forward_impl.10} parent=0 // pred_fallthru
    _

// kernel: _forward_impl.11
$region0: #{_forward_impl.11}
  #allocation0 [shape = 'u32[]', space=smem, size = 0x4, offset = 0x4, fixed_abs, tag = 'smem constant byte address 0x4 - core index']
  #allocation1 [shape = 'u32[144,128]{1,0:T(1,128)}', space=vmem, size = 0x12000, scoped, tag = 'internal scratch']
  #allocation2 [shape = 'f32[5]{0:T(128)}', space=smem, size = 0x200, scoped, tag = 'scratch operand']
  %s0 = inlined_call_operand.vmem [shape: f32[6,128], index: 0, kind: input, shape index: {}]
  %s1 = inlined_call_operand.vmem [shape: f32[6,128], index: 1, kind: input, shape index: {}]
  %s2 = inlined_call_operand.vmem [shape: f32[3,128], index: 2, kind: input, shape index: {}]
  %s3 = inlined_call_operand.vmem [shape: f32[5], index: 3, kind: output, shape index: {}]
  %s4 = sld [smem:[#allocation0]]
  $region30: #{_forward_impl.11} parent=0
    _
  %s6 = ssub.s32 1, %s4
  %s7 = scalar_select 0, %s6, %s4
  $region1: #{_forward_impl.11} parent=0
    #allocation3 [shape = 'u8[512]{0}', space=smem, size = 0x200, scoped, tag = 'output window, operand 0, single buffered']
    #allocation4 [shape = 's32[1]{0}', space=sflag, size = 0x4, scoped, tag = 'scoped memory for _forward_impl.11']
    %8 = vsyncpa [#allocation4], 0
    // Predicated region
    $region2: #{_forward_impl.11} parent=1 // pred_check
      _
    $region3: #{_forward_impl.11} parent=1 // pred_check_branch
      %10 = sbr.rel (0) target = $region5
    $region4: #{_forward_impl.11} parent=1 // pred_region
      _
    $region5: #{_forward_impl.11} parent=1 // pred_fallthru
      _
    // Predicated region
    $region6: #{_forward_impl.11} parent=1 // pred_check
      _
    $region7: #{_forward_impl.11} parent=1 // pred_check_branch
      %12 = sbr.rel (0) target = $region9
    $region8: #{_forward_impl.11} parent=1 // pred_region
      _
    $region9: #{_forward_impl.11} parent=1 // pred_fallthru
      _
    // Predicated region
    $region10: #{_forward_impl.11} parent=1 // pred_check
      _
    $region11: #{_forward_impl.11} parent=1 // pred_check_branch
      %14 = sbr.rel (0) target = $region13
    $region12: #{_forward_impl.11} parent=1 // pred_region
      _
    $region13: #{_forward_impl.11} parent=1 // pred_fallthru
      _
    %p15 = scmp.eq.s32.totalorder 0, 0
    // Predicated region
    $region14: #{_forward_impl.11} parent=1 // pred_check
      %p16 = pneg %p15
    $region15: #{_forward_impl.11} parent=1 // pred_check_branch
      %18 = sbr.rel (%p16) target = $region17
    $region16: #{_forward_impl.11} parent=1 // pred_region
      %s19 = scalar_lea.smem [#allocation2], 0
      %20 = sst [smem:[%s19]] 0.0
      %s21 = scalar_lea.smem [#allocation2], 1
      %22 = sst [smem:[%s21]] 0.0
      %s23 = scalar_lea.smem [#allocation2], 2
      %24 = sst [smem:[%s23]] 0.0
      %s25 = scalar_lea.smem [#allocation2], 3
      %26 = sst [smem:[%s25]] 0.0
      %s27 = scalar_lea.smem [#allocation2], 4
      %28 = sst [smem:[%s27]] 0.0
    $region17: #{_forward_impl.11} parent=1 // pred_fallthru
      _
    %v29 = vld [vmem:[%s0] sm:$0x3f]
    %v30 = vld [vmem:[%s1] sm:$0x3f]
    %v31 = vld [vmem:[%s2] sm:$0x1]
    %v32 = vld [vmem:[%s2 + $0x1] sm:$0x1]
    %v33 = vld [vmem:[%s2 + $0x2] sm:$0x1]
    %v34 = vlaneseq
    %v35 = vshrl.u32 %v34, 7
    %vm36 = vcmp.eq.s32.totalorder %v35, 2
    %vm37 = vcmp.eq.s32.totalorder %v35, 3
    %vm38 = vmor %vm36, %vm37
    %v39 = vxor.u32 %v29, 2147483648
    %v40 = vmul.f32 %v39, 1.442695
    %v41 = vpow.pop %v40
    %v42 = vadd.f32 %v41, 1.0
    %v43 = vrcp.pop %v42
    %v44 = vmul.f32 1.0, %v43
    %v45 = vlog2.pop %v44
    %v46 = vmul.f32 %v45, 0.6931472
    %v47 = vmax.f32 %v46, -100.0
    %v48 = vsub.f32 1.0, %v44
    %v49 = vlog2.pop %v48
    %v50 = vmul.f32 %v49, 0.6931472
    %v51 = vmax.f32 %v50, -100.0
    %v52 = vmul.f32 %v30, %v47
    %v53 = vsub.f32 1.0, %v30
    %v54 = vmul.f32 %v53, %v51
    %v55 = vadd.f32 %v52, %v54
    %v56 = vsub.f32 0.0, %v55
    %v57 = vsub.f32 %v44, %v30
    %v58 = vmul.f32 %v57, %v57
    %v59 = vmul.f32 %v33, %v33
    %v60 = vsub.f32 %v29, %v30
    %v61 = vmul.f32 %v60, %v60
    %v62 = vlaneseq
    %v63 = vshrl.u32 %v62, 7
    %v64 = vsub.s32 0, %v63
    %v65 = vrot.slane %v59, %v64
    %v66 = vmul.f32 %v65, %v61
    %vm67 = vcmp.eq.s32.totalorder %v35, 4
    %v68 = vlaneseq
    %v69 = vshrl.u32 %v68, 7
    %v70 = vsub.s32 0, %v69
    %v71 = vrot.slane %v31, %v70
    %v72 = vlaneseq
    %v73 = vshrl.u32 %v72, 7
    %v74 = vsub.s32 0, %v73
    %v75 = vrot.slane %v32, %v74
    %v76 = vsel %vm67, %v71, %v75
    %vm77 = vcmp.lt.s32.totalorder %v35, 2
    %v78 = vmul.f32 %v32, %v59
    %v79 = vlaneseq
    %v80 = vshrl.u32 %v79, 7
    %v81 = vsub.s32 0, %v80
    %v82 = vrot.slane %v78, %v81
    %v83 = vmul.f32 %v82, %v56
    %v84 = vsel %vm77, %v83, 0.0
    %v85 = vmul.f32 %v75, %v66
    %v86 = vsel %vm38, %v85, 0.0
    %v87 = vmul.f32 %v71, %v56
    %v88 = vsel %vm67, %v87, 0.0
    %vm89 = vcmp.ge.s32.totalorder %v35, 5
    %v90 = vmul.f32 %v75, %v56
    %v91 = vsel %vm89, %v90, 0.0
    %v92 = vmul.f32 %v76, %v58
    %v93 = vsel %vm38, %v85, %v92
    %s94 = sld [smem:[#allocation2]]
    %vm95 = vcmask 1045504
    %v96 = vsel %vm95, %v84, 0.0
    %97 = vadd.xlane.f32.xlu0 %v96
    %v98 = vpop.xlane.xlu0 %97
    %v99 = vrot.slane %v98, 4
    %v100 = vadd.f32 %v98, %v99
    %v101 = vrot.slane %v100, 2
    %v102 = vadd.f32 %v100, %v101
    %v103 = vrot.slane %v102, 1
    %v104 = vadd.f32 %v102, %v103
    %s105 = vtos %v104
    %s106 = sadd.f32 %s94, %s105
    %s107 = scalar_lea.smem [#allocation2], 0
    %108 = sst [smem:[%s107]] %s106
    %s109 = sld [smem:[#allocation2 + $0x1]]
    %v110 = vsel %vm95, %v86, 0.0
    %111 = vadd.xlane.f32.xlu0 %v110
    %v112 = vpop.xlane.xlu0 %111
    %v113 = vrot.slane %v112, 4
    %v114 = vadd.f32 %v112, %v113
    %v115 = vrot.slane %v114, 2
    %v116 = vadd.f32 %v114, %v115
    %v117 = vrot.slane %v116, 1
    %v118 = vadd.f32 %v116, %v117
    %s119 = vtos %v118
    %s120 = smul.f32 %s119, 0.5
    %s121 = sadd.f32 %s109, %s120
    %s122 = scalar_lea.smem [#allocation2], 1
    %123 = sst [smem:[%s122]] %s121
    %s124 = sld [smem:[#allocation2 + $0x2]]
    %v125 = vsel %vm95, %v88, 0.0
    %126 = vadd.xlane.f32.xlu0 %v125
    %v127 = vpop.xlane.xlu0 %126
    %v128 = vrot.slane %v127, 4
    %v129 = vadd.f32 %v127, %v128
    %v130 = vrot.slane %v129, 2
    %v131 = vadd.f32 %v129, %v130
    %v132 = vrot.slane %v131, 1
    %v133 = vadd.f32 %v131, %v132
    %s134 = vtos %v133
    %s135 = sadd.f32 %s124, %s134
    %s136 = scalar_lea.smem [#allocation2], 2
    %137 = sst [smem:[%s136]] %s135
    %s138 = sld [smem:[#allocation2 + $0x3]]
    %v139 = vsel %vm95, %v91, 0.0
    %140 = vadd.xlane.f32.xlu0 %v139
    %v141 = vpop.xlane.xlu0 %140
    %v142 = vrot.slane %v141, 4
    %v143 = vadd.f32 %v141, %v142
    %v144 = vrot.slane %v143, 2
    %v145 = vadd.f32 %v143, %v144
    %v146 = vrot.slane %v145, 1
    %v147 = vadd.f32 %v145, %v146
    %s148 = vtos %v147
    %s149 = sadd.f32 %s138, %s148
    %s150 = scalar_lea.smem [#allocation2], 3
    %151 = sst [smem:[%s150]] %s149
    %s152 = sld [smem:[#allocation2 + $0x4]]
    %v153 = vsel %vm95, %v93, 0.0
    %154 = vadd.xlane.f32.xlu0 %v153
    %v155 = vpop.xlane.xlu0 %154
    %v156 = vrot.slane %v155, 4
    %v157 = vadd.f32 %v155, %v156
    %v158 = vrot.slane %v157, 2
    %v159 = vadd.f32 %v157, %v158
    %v160 = vrot.slane %v159, 1
    %v161 = vadd.f32 %v159, %v160
    %s162 = vtos %v161
    %s163 = sadd.f32 %s152, %s162
    %s164 = scalar_lea.smem [#allocation2], 4
    %165 = sst [smem:[%s164]] %s163
    // Predicated region
    $region18: #{_forward_impl.11} parent=1 // pred_check
      %p166 = pneg %p15
    $region19: #{_forward_impl.11} parent=1 // pred_check_branch
      %168 = sbr.rel (%p166) target = $region21
    $region20: #{_forward_impl.11} parent=1 // pred_region
      %s169 = sld [smem:[#allocation2]]
      %s170 = scalar_lea.smem [#allocation3], 0
      %171 = sst [smem:[%s170]] %s169
      %s172 = sld [smem:[#allocation2 + $0x1]]
      %s173 = scalar_lea.smem [#allocation3], 1
      %174 = sst [smem:[%s173]] %s172
      %s175 = sld [smem:[#allocation2 + $0x2]]
      %s176 = scalar_lea.smem [#allocation3], 2
      %177 = sst [smem:[%s176]] %s175
      %s178 = sld [smem:[#allocation2 + $0x3]]
      %s179 = scalar_lea.smem [#allocation3], 3
      %180 = sst [smem:[%s179]] %s178
      %s181 = sld [smem:[#allocation2 + $0x4]]
      %s182 = scalar_lea.smem [#allocation3], 4
      %183 = sst [smem:[%s182]] %s181
    $region21: #{_forward_impl.11} parent=1 // pred_fallthru
      _
    // Predicated region
    $region22: #{_forward_impl.11} parent=1 // pred_check
      _
    $region23: #{_forward_impl.11} parent=1 // pred_check_branch
      %185 = sbr.rel (0) target = $region25
    $region24: #{_forward_impl.11} parent=1 // pred_region
      %s187 = ssub.s32 16, 16
      %188 = vsyncadd [#allocation4], %s187
      %s190 = sshll.u32 %s3, 4
      %s191 = int_to_ptr.vmem [resolvable:$true] %s190
      %193 = dma.smem_to_vmem [#allocation3], 16, %s191, [#allocation4]
    $region25: #{_forward_impl.11} parent=1 // pred_fallthru
      _
    // Predicated region
    $region26: #{_forward_impl.11} parent=1 // pred_check
      _
    $region27: #{_forward_impl.11} parent=1 // pred_check_branch
      %195 = sbr.rel (0) target = $region29
    $region28: #{_forward_impl.11} parent=1 // pred_region
      %196 = dma.done [#allocation4], 16
    $region29: #{_forward_impl.11} parent=1 // pred_fallthru
      _
    %197 = sfence
    %198 = vsyncpa [#allocation4], 1

// kernel: _forward_impl.8
$region0: #{_forward_impl.8}
  #allocation0 [shape = 'u32[]', space=smem, size = 0x4, offset = 0x4, fixed_abs, tag = 'smem constant byte address 0x4 - core index']
  #allocation1 [shape = 'u32[144,128]{1,0:T(1,128)}', space=vmem, size = 0x12000, scoped, tag = 'internal scratch']
  %s0 = inlined_call_operand.vmem [shape: f32[6,384], index: 0, kind: input, shape index: {}]
  %s1 = inlined_call_operand.vmem [shape: s32[1,384], index: 1, kind: input, shape index: {}]
  %s2 = inlined_call_operand.vmem [shape: f32[4,384], index: 2, kind: output, shape index: {}]
  %s3 = sld [smem:[#allocation0]]
  $region18: #{_forward_impl.8} parent=0
    _
  %s5 = ssub.s32 1, %s3
  %s6 = scalar_select 0, %s5, %s3
  // Predicated region
  $region2: #{_forward_impl.8} parent=0 // pred_check
    _
  $region3: #{_forward_impl.8} parent=0 // pred_check_branch
    %8 = sbr.rel (0) target = $region5
  $region4: #{_forward_impl.8} parent=0 // pred_region
    _
  $region5: #{_forward_impl.8} parent=0 // pred_fallthru
    _
  // Predicated region
  $region6: #{_forward_impl.8} parent=0 // pred_check
    _
  $region7: #{_forward_impl.8} parent=0 // pred_check_branch
    %10 = sbr.rel (0) target = $region9
  $region8: #{_forward_impl.8} parent=0 // pred_region
    _
  $region9: #{_forward_impl.8} parent=0 // pred_fallthru
    _
  %v11 = vld [vmem:[%s1] sm:$0x7]
  %v12 = vand.u32 %v11, 127
  %v13 = vcvt.s32.f32 %v12
  %v14 = vshra.s32 %v11, 7
  %v15 = vand.u32 %v14, 127
  %v16 = vcvt.s32.f32 %v15
  %v17 = vshra.s32 %v11, 14
  %vm18 = vcmp.eq.s32.totalorder %v17, 0
  %vm19 = vcmp.eq.s32.totalorder %v17, 1
  %v20 = vsel %vm19, 4.75, 4.5
  %v21 = vsel %vm18, 2.25, %v20
  %v22 = vsel %vm19, 3.4375, 9.125
  %v23 = vsel %vm18, 4.6875, %v22
  %v24 = vld [vmem:[%s0] ss:$8 sm:$0x7]
  %v25 = vxor.u32 %v24, 2147483648
  %v26 = vmul.f32 %v25, 1.442695
  %v27 = vpow.pop %v26
  %v28 = vadd.f32 %v27, 1.0
  %v29 = vrcp.pop %v28
  %v30 = vmul.f32 1.0, %v29
  %v31 = vadd.f32 %v30, %v13
  %v32 = vlaneseq
  %vm33 = vcmp.ge.s32.totalorder %v32, 0
  %vm34 = vcmp.lt.s32.totalorder %v32, 384
  %vm35 = vmand %vm33, %vm34
  %36 = vst.msk [vmem:[%s2] ss:$4 sm:$0x7] %vm35, %v31
  %s37 = scalar_lea.vmem %s0, 1
  %v38 = vld [vmem:[%s37] ss:$8 sm:$0x7]
  %v39 = vxor.u32 %v38, 2147483648
  %v40 = vmul.f32 %v39, 1.442695
  %v41 = vpow.pop %v40
  %v42 = vadd.f32 %v41, 1.0
  %v43 = vrcp.pop %v42
  %v44 = vmul.f32 1.0, %v43
  %v45 = vadd.f32 %v44, %v16
  %s46 = scalar_lea.vmem %s2, 1
  %47 = vst.msk [vmem:[%s46] ss:$4 sm:$0x7] %vm35, %v45
  %s48 = scalar_lea.vmem %s0, 2
  %v49 = vld [vmem:[%s48] ss:$8 sm:$0x7]
  %v50 = vmul.f32 %v49, 1.442695
  %v51 = vpow.pop %v50
  %v52 = vmul.f32 %v51, %v21
  %s53 = scalar_lea.vmem %s2, 2
  %54 = vst.msk [vmem:[%s53] ss:$4 sm:$0x7] %vm35, %v52
  %s55 = scalar_lea.vmem %s0, 3
  %v56 = vld [vmem:[%s55] ss:$8 sm:$0x7]
  %v57 = vmul.f32 %v56, 1.442695
  %v58 = vpow.pop %v57
  %v59 = vmul.f32 %v58, %v23
  %s60 = scalar_lea.vmem %s2, 3
  %61 = vst.msk [vmem:[%s60] ss:$4 sm:$0x7] %vm35, %v59
  // Predicated region
  $region10: #{_forward_impl.8} parent=0 // pred_check
    _
  $region11: #{_forward_impl.8} parent=0 // pred_check_branch
    %63 = sbr.rel (0) target = $region13
  $region12: #{_forward_impl.8} parent=0 // pred_region
    _
  $region13: #{_forward_impl.8} parent=0 // pred_fallthru
    _
  // Predicated region
  $region14: #{_forward_impl.8} parent=0 // pred_check
    _
  $region15: #{_forward_impl.8} parent=0 // pred_check_branch
    %65 = sbr.rel (0) target = $region17
  $region16: #{_forward_impl.8} parent=0 // pred_region
    _
  $region17: #{_forward_impl.8} parent=0 // pred_fallthru
    _

// kernel: _forward_impl.9
$region0: #{_forward_impl.9}
  #allocation0 [shape = 'u32[]', space=smem, size = 0x4, offset = 0x4, fixed_abs, tag = 'smem constant byte address 0x4 - core index']
  #allocation1 [shape = 'u32[144,128]{1,0:T(1,128)}', space=vmem, size = 0x12000, scoped, tag = 'internal scratch']
  #allocation2 [shape = 'f32[5]{0:T(128)}', space=smem, size = 0x200, scoped, tag = 'scratch operand']
  %s0 = inlined_call_operand.vmem [shape: f32[6,384], index: 0, kind: input, shape index: {}]
  %s1 = inlined_call_operand.vmem [shape: f32[6,384], index: 1, kind: input, shape index: {}]
  %s2 = inlined_call_operand.vmem [shape: f32[3,384], index: 2, kind: input, shape index: {}]
  %s3 = inlined_call_operand.vmem [shape: f32[5], index: 3, kind: output, shape index: {}]
  %s4 = sld [smem:[#allocation0]]
  $region30: #{_forward_impl.9} parent=0
    _
  %s6 = ssub.s32 1, %s4
  %s7 = scalar_select 0, %s6, %s4
  $region1: #{_forward_impl.9} parent=0
    #allocation3 [shape = 'u8[512]{0}', space=smem, size = 0x200, scoped, tag = 'output window, operand 0, single buffered']
    #allocation4 [shape = 's32[1]{0}', space=sflag, size = 0x4, scoped, tag = 'scoped memory for _forward_impl.9']
    %8 = vsyncpa [#allocation4], 0
    // Predicated region
    $region2: #{_forward_impl.9} parent=1 // pred_check
      _
    $region3: #{_forward_impl.9} parent=1 // pred_check_branch
      %10 = sbr.rel (0) target = $region5
    $region4: #{_forward_impl.9} parent=1 // pred_region
      _
    $region5: #{_forward_impl.9} parent=1 // pred_fallthru
      _
    // Predicated region
    $region6: #{_forward_impl.9} parent=1 // pred_check
      _
    $region7: #{_forward_impl.9} parent=1 // pred_check_branch
      %12 = sbr.rel (0) target = $region9
    $region8: #{_forward_impl.9} parent=1 // pred_region
      _
    $region9: #{_forward_impl.9} parent=1 // pred_fallthru
      _
    // Predicated region
    $region10: #{_forward_impl.9} parent=1 // pred_check
      _
    $region11: #{_forward_impl.9} parent=1 // pred_check_branch
      %14 = sbr.rel (0) target = $region13
    $region12: #{_forward_impl.9} parent=1 // pred_region
      _
    $region13: #{_forward_impl.9} parent=1 // pred_fallthru
      _
    %p15 = scmp.eq.s32.totalorder 0, 0
    // Predicated region
    $region14: #{_forward_impl.9} parent=1 // pred_check
      %p16 = pneg %p15
    $region15: #{_forward_impl.9} parent=1 // pred_check_branch
      %18 = sbr.rel (%p16) target = $region17
    $region16: #{_forward_impl.9} parent=1 // pred_region
      %s19 = scalar_lea.smem [#allocation2], 0
      %20 = sst [smem:[%s19]] 0.0
      %s21 = scalar_lea.smem [#allocation2], 1
      %22 = sst [smem:[%s21]] 0.0
      %s23 = scalar_lea.smem [#allocation2], 2
      %24 = sst [smem:[%s23]] 0.0
      %s25 = scalar_lea.smem [#allocation2], 3
      %26 = sst [smem:[%s25]] 0.0
      %s27 = scalar_lea.smem [#allocation2], 4
      %28 = sst [smem:[%s27]] 0.0
    $region17: #{_forward_impl.9} parent=1 // pred_fallthru
      _
    %v29 = vld [vmem:[%s0] sm:$0x3f]
    %v30 = vld [vmem:[%s0 + $0x8] sm:$0x3f]
    %v31 = vld [vmem:[%s0 + $0x10] sm:$0x3f]
    %v32 = vld [vmem:[%s1] sm:$0x3f]
    %v33 = vld [vmem:[%s1 + $0x8] sm:$0x3f]
    %v34 = vld [vmem:[%s1 + $0x10] sm:$0x3f]
    %v35 = vld [vmem:[%s2] ss:$4 sm:$0x7]
    %s36 = scalar_lea.vmem %s2, 1
    %v37 = vld [vmem:[%s36] ss:$4 sm:$0x7]
    %s38 = scalar_lea.vmem %s2, 2
    %v39 = vld [vmem:[%s38] ss:$4 sm:$0x7]
    %v40 = vlaneseq
    %v41 = vshrl.u32 %v40, 7
    %vm42 = vcmp.eq.s32.totalorder %v41, 2
    %vm43 = vcmp.eq.s32.totalorder %v41, 3
    %vm44 = vmor %vm42, %vm43
    %v45 = vxor.u32 %v29, 2147483648
    %v46 = vxor.u32 %v30, 2147483648
    %v47 = vxor.u32 %v31, 2147483648
    %v48 = vmul.f32 %v45, 1.442695
    %v49 = vpow.pop %v48
    %v50 = vmul.f32 %v46, 1.442695
    %v51 = vpow.pop %v50
    %v52 = vmul.f32 %v47, 1.442695
    %v53 = vpow.pop %v52
    %v54 = vadd.f32 %v49, 1.0
    %v55 = vadd.f32 %v51, 1.0
    %v56 = vadd.f32 %v53, 1.0
    %v57 = vrcp.pop %v54
    %v58 = vmul.f32 1.0, %v57
    %v59 = vrcp.pop %v55
    %v60 = vmul.f32 1.0, %v59
    %v61 = vrcp.pop %v56
    %v62 = vmul.f32 1.0, %v61
    %v63 = vlog2.pop %v58
    %v64 = vmul.f32 %v63, 0.6931472
    %v65 = vlog2.pop %v60
    %v66 = vmul.f32 %v65, 0.6931472
    %v67 = vlog2.pop %v62
    %v68 = vmul.f32 %v67, 0.6931472
    %v69 = vmax.f32 %v64, -100.0
    %v70 = vmax.f32 %v66, -100.0
    %v71 = vmax.f32 %v68, -100.0
    %v72 = vsub.f32 1.0, %v58
    %v73 = vsub.f32 1.0, %v60
    %v74 = vsub.f32 1.0, %v62
    %v75 = vlog2.pop %v72
    %v76 = vmul.f32 %v75, 0.6931472
    %v77 = vlog2.pop %v73
    %v78 = vmul.f32 %v77, 0.6931472
    %v79 = vlog2.pop %v74
    %v80 = vmul.f32 %v79, 0.6931472
    %v81 = vmax.f32 %v76, -100.0
    %v82 = vmax.f32 %v78, -100.0
    %v83 = vmax.f32 %v80, -100.0
    %v84 = vmul.f32 %v32, %v69
    %v85 = vmul.f32 %v33, %v70
    %v86 = vmul.f32 %v34, %v71
    %v87 = vsub.f32 1.0, %v32
    %v88 = vsub.f32 1.0, %v33
    %v89 = vsub.f32 1.0, %v34
    %v90 = vmul.f32 %v87, %v81
    %v91 = vmul.f32 %v88, %v82
    %v92 = vmul.f32 %v89, %v83
    %v93 = vadd.f32 %v84, %v90
    %v94 = vadd.f32 %v85, %v91
    %v95 = vadd.f32 %v86, %v92
    %v96 = vsub.f32 0.0, %v93
    %v97 = vsub.f32 0.0, %v94
    %v98 = vsub.f32 0.0, %v95
    %v99 = vsub.f32 %v58, %v32
    %v100 = vsub.f32 %v60, %v33
    %v101 = vsub.f32 %v62, %v34
    %v102 = vmul.f32 %v99, %v99
    %v103 = vmul.f32 %v100, %v100
    %v104 = vmul.f32 %v101, %v101
    %v105 = vmul.f32 %v39, %v39
    %v106 = vsub.f32 %v29, %v32
    %v107 = vsub.f32 %v30, %v33
    %v108 = vsub.f32 %v31, %v34
    %v109 = vmul.f32 %v106, %v106
    %v110 = vmul.f32 %v107, %v107
    %v111 = vmul.f32 %v108, %v108
    %v113 = vlaneseq
    %v114 = vshrl.u32 %v113, 7
    %v115 = vsub.s32 0, %v114
    %v116 = vrot.slane %v105, %v115
    %v117 = vlaneseq
    %v118 = vshrl.u32 %v117, 7
    %v119 = vsub.s32 1, %v118
    %v120 = vrot.slane %v105, %v119
    %v121 = vlaneseq
    %v122 = vshrl.u32 %v121, 7
    %v123 = vsub.s32 2, %v122
    %v124 = vrot.slane %v105, %v123
    %v128 = vmul.f32 %v116, %v109
    %v129 = vmul.f32 %v120, %v110
    %v130 = vmul.f32 %v124, %v111
    %vm131 = vcmp.eq.s32.totalorder %v41, 4
    %v133 = vlaneseq
    %v134 = vshrl.u32 %v133, 7
    %v135 = vsub.s32 0, %v134
    %v136 = vrot.slane %v35, %v135
    %v137 = vlaneseq
    %v138 = vshrl.u32 %v137, 7
    %v139 = vsub.s32 1, %v138
    %v140 = vrot.slane %v35, %v139
    %v141 = vlaneseq
    %v142 = vshrl.u32 %v141, 7
    %v143 = vsub.s32 2, %v142
    %v144 = vrot.slane %v35, %v143
    %v149 = vlaneseq
    %v150 = vshrl.u32 %v149, 7
    %v151 = vsub.s32 0, %v150
    %v152 = vrot.slane %v37, %v151
    %v153 = vlaneseq
    %v154 = vshrl.u32 %v153, 7
    %v155 = vsub.s32 1, %v154
    %v156 = vrot.slane %v37, %v155
    %v157 = vlaneseq
    %v158 = vshrl.u32 %v157, 7
    %v159 = vsub.s32 2, %v158
    %v160 = vrot.slane %v37, %v159
    %v164 = vsel %vm131, %v136, %v152
    %v165 = vsel %vm131, %v140, %v156
    %v166 = vsel %vm131, %v144, %v160
    %vm167 = vcmp.lt.s32.totalorder %v41, 2
    %v168 = vmul.f32 %v37, %v105
    %v170 = vlaneseq
    %v171 = vshrl.u32 %v170, 7
    %v172 = vsub.s32 0, %v171
    %v173 = vrot.slane %v168, %v172
    %v174 = vlaneseq
    %v175 = vshrl.u32 %v174, 7
    %v176 = vsub.s32 1, %v175
    %v177 = vrot.slane %v168, %v176
    %v178 = vlaneseq
    %v179 = vshrl.u32 %v178, 7
    %v180 = vsub.s32 2, %v179
    %v181 = vrot.slane %v168, %v180
    %v185 = vmul.f32 %v173, %v96
    %v186 = vmul.f32 %v177, %v97
    %v187 = vmul.f32 %v181, %v98
    %v188 = vsel %vm167, %v185, 0.0
    %v189 = vsel %vm167, %v186, 0.0
    %v190 = vsel %vm167, %v187, 0.0
    %v191 = vmul.f32 %v152, %v128
    %v192 = vmul.f32 %v156, %v129
    %v193 = vmul.f32 %v160, %v130
    %v194 = vsel %vm44, %v191, 0.0
    %v195 = vsel %vm44, %v192, 0.0
    %v196 = vsel %vm44, %v193, 0.0
    %v197 = vmul.f32 %v136, %v96
    %v198 = vmul.f32 %v140, %v97
    %v199 = vmul.f32 %v144, %v98
    %v200 = vsel %vm131, %v197, 0.0
    %v201 = vsel %vm131, %v198, 0.0
    %v202 = vsel %vm131, %v199, 0.0
    %vm203 = vcmp.ge.s32.totalorder %v41, 5
    %v204 = vmul.f32 %v152, %v96
    %v205 = vmul.f32 %v156, %v97
    %v206 = vmul.f32 %v160, %v98
    %v207 = vsel %vm203, %v204, 0.0
    %v208 = vsel %vm203, %v205, 0.0
    %v209 = vsel %vm203, %v206, 0.0
    %v210 = vmul.f32 %v164, %v102
    %v211 = vmul.f32 %v165, %v103
    %v212 = vmul.f32 %v166, %v104
    %v213 = vsel %vm44, %v191, %v210
    %v214 = vsel %vm44, %v192, %v211
    %v215 = vsel %vm44, %v193, %v212
    %s216 = sld [smem:[#allocation2]]
    %vm217 = vcmask 1045504
    %v218 = vsel %vm217, %v188, 0.0
    %v219 = vsel %vm217, %v189, 0.0
    %v220 = vadd.f32 %v218, %v219
    %v221 = vsel %vm217, %v190, 0.0
    %v222 = vadd.f32 %v220, %v221
    %223 = vadd.xlane.f32.xlu0 %v222
    %v224 = vpop.xlane.xlu0 %223
    %v225 = vrot.slane %v224, 4
    %v226 = vadd.f32 %v224, %v225
    %v227 = vrot.slane %v226, 2
    %v228 = vadd.f32 %v226, %v227
    %v229 = vrot.slane %v228, 1
    %v230 = vadd.f32 %v228, %v229
    %s231 = vtos %v230
    %s232 = sadd.f32 %s216, %s231
    %s233 = scalar_lea.smem [#allocation2], 0
    %234 = sst [smem:[%s233]] %s232
    %s235 = sld [smem:[#allocation2 + $0x1]]
    %v236 = vsel %vm217, %v194, 0.0
    %v237 = vsel %vm217, %v195, 0.0
    %v238 = vadd.f32 %v236, %v237
    %v239 = vsel %vm217, %v196, 0.0
    %v240 = vadd.f32 %v238, %v239
    %241 = vadd.xlane.f32.xlu0 %v240
    %v242 = vpop.xlane.xlu0 %241
    %v243 = vrot.slane %v242, 4
    %v244 = vadd.f32 %v242, %v243
    %v245 = vrot.slane %v244, 2
    %v246 = vadd.f32 %v244, %v245
    %v247 = vrot.slane %v246, 1
    %v248 = vadd.f32 %v246, %v247
    %s249 = vtos %v248
    %s250 = smul.f32 %s249, 0.5
    %s251 = sadd.f32 %s235, %s250
    %s252 = scalar_lea.smem [#allocation2], 1
    %253 = sst [smem:[%s252]] %s251
    %s254 = sld [smem:[#allocation2 + $0x2]]
    %v255 = vsel %vm217, %v200, 0.0
    %v256 = vsel %vm217, %v201, 0.0
    %v257 = vadd.f32 %v255, %v256
    %v258 = vsel %vm217, %v202, 0.0
    %v259 = vadd.f32 %v257, %v258
    %260 = vadd.xlane.f32.xlu0 %v259
    %v261 = vpop.xlane.xlu0 %260
    %v262 = vrot.slane %v261, 4
    %v263 = vadd.f32 %v261, %v262
    %v264 = vrot.slane %v263, 2
    %v265 = vadd.f32 %v263, %v264
    %v266 = vrot.slane %v265, 1
    %v267 = vadd.f32 %v265, %v266
    %s268 = vtos %v267
    %s269 = sadd.f32 %s254, %s268
    %s270 = scalar_lea.smem [#allocation2], 2
    %271 = sst [smem:[%s270]] %s269
    %s272 = sld [smem:[#allocation2 + $0x3]]
    %v273 = vsel %vm217, %v207, 0.0
    %v274 = vsel %vm217, %v208, 0.0
    %v275 = vadd.f32 %v273, %v274
    %v276 = vsel %vm217, %v209, 0.0
    %v277 = vadd.f32 %v275, %v276
    %278 = vadd.xlane.f32.xlu0 %v277
    %v279 = vpop.xlane.xlu0 %278
    %v280 = vrot.slane %v279, 4
    %v281 = vadd.f32 %v279, %v280
    %v282 = vrot.slane %v281, 2
    %v283 = vadd.f32 %v281, %v282
    %v284 = vrot.slane %v283, 1
    %v285 = vadd.f32 %v283, %v284
    %s286 = vtos %v285
    %s287 = sadd.f32 %s272, %s286
    %s288 = scalar_lea.smem [#allocation2], 3
    %289 = sst [smem:[%s288]] %s287
    %s290 = sld [smem:[#allocation2 + $0x4]]
    %v291 = vsel %vm217, %v213, 0.0
    %v292 = vsel %vm217, %v214, 0.0
    %v293 = vadd.f32 %v291, %v292
    %v294 = vsel %vm217, %v215, 0.0
    %v295 = vadd.f32 %v293, %v294
    %296 = vadd.xlane.f32.xlu0 %v295
    %v297 = vpop.xlane.xlu0 %296
    %v298 = vrot.slane %v297, 4
    %v299 = vadd.f32 %v297, %v298
    %v300 = vrot.slane %v299, 2
    %v301 = vadd.f32 %v299, %v300
    %v302 = vrot.slane %v301, 1
    %v303 = vadd.f32 %v301, %v302
    %s304 = vtos %v303
    %s305 = sadd.f32 %s290, %s304
    %s306 = scalar_lea.smem [#allocation2], 4
    %307 = sst [smem:[%s306]] %s305
    // Predicated region
    $region18: #{_forward_impl.9} parent=1 // pred_check
      %p308 = pneg %p15
    $region19: #{_forward_impl.9} parent=1 // pred_check_branch
      %310 = sbr.rel (%p308) target = $region21
    $region20: #{_forward_impl.9} parent=1 // pred_region
      %s311 = sld [smem:[#allocation2]]
      %s312 = scalar_lea.smem [#allocation3], 0
      %313 = sst [smem:[%s312]] %s311
      %s314 = sld [smem:[#allocation2 + $0x1]]
      %s315 = scalar_lea.smem [#allocation3], 1
      %316 = sst [smem:[%s315]] %s314
      %s317 = sld [smem:[#allocation2 + $0x2]]
      %s318 = scalar_lea.smem [#allocation3], 2
      %319 = sst [smem:[%s318]] %s317
      %s320 = sld [smem:[#allocation2 + $0x3]]
      %s321 = scalar_lea.smem [#allocation3], 3
      %322 = sst [smem:[%s321]] %s320
      %s323 = sld [smem:[#allocation2 + $0x4]]
      %s324 = scalar_lea.smem [#allocation3], 4
      %325 = sst [smem:[%s324]] %s323
    $region21: #{_forward_impl.9} parent=1 // pred_fallthru
      _
    // Predicated region
    $region22: #{_forward_impl.9} parent=1 // pred_check
      _
    $region23: #{_forward_impl.9} parent=1 // pred_check_branch
      %327 = sbr.rel (0) target = $region25
    $region24: #{_forward_impl.9} parent=1 // pred_region
      %s329 = ssub.s32 16, 16
      %330 = vsyncadd [#allocation4], %s329
      %s332 = sshll.u32 %s3, 4
      %s333 = int_to_ptr.vmem [resolvable:$true] %s332
      %335 = dma.smem_to_vmem [#allocation3], 16, %s333, [#allocation4]
    $region25: #{_forward_impl.9} parent=1 // pred_fallthru
      _
    // Predicated region
    $region26: #{_forward_impl.9} parent=1 // pred_check
      _
    $region27: #{_forward_impl.9} parent=1 // pred_check_branch
      %337 = sbr.rel (0) target = $region29
    $region28: #{_forward_impl.9} parent=1 // pred_region
      %338 = dma.done [#allocation4], 16
    $region29: #{_forward_impl.9} parent=1 // pred_fallthru
      _
    %339 = sfence
    %340 = vsyncpa [#allocation4], 1

// kernel: _forward_impl.6
$region0: #{_forward_impl.6}
  #allocation0 [shape = 'u32[]', space=smem, size = 0x4, offset = 0x4, fixed_abs, tag = 'smem constant byte address 0x4 - core index']
  #allocation1 [shape = 'u32[144,128]{1,0:T(1,128)}', space=vmem, size = 0x12000, scoped, tag = 'internal scratch']
  %s0 = inlined_call_operand.vmem [shape: f32[6,1536], index: 0, kind: input, shape index: {}]
  %s1 = inlined_call_operand.vmem [shape: s32[1,1536], index: 1, kind: input, shape index: {}]
  %s2 = inlined_call_operand.vmem [shape: f32[4,1536], index: 2, kind: output, shape index: {}]
  %s3 = sld [smem:[#allocation0]]
  $region18: #{_forward_impl.6} parent=0
    _
  %s5 = ssub.s32 1, %s3
  %s6 = scalar_select 0, %s5, %s3
  // Predicated region
  $region2: #{_forward_impl.6} parent=0 // pred_check
    _
  $region3: #{_forward_impl.6} parent=0 // pred_check_branch
    %8 = sbr.rel (0) target = $region5
  $region4: #{_forward_impl.6} parent=0 // pred_region
    _
  $region5: #{_forward_impl.6} parent=0 // pred_fallthru
    _
  // Predicated region
  $region6: #{_forward_impl.6} parent=0 // pred_check
    _
  $region7: #{_forward_impl.6} parent=0 // pred_check_branch
    %10 = sbr.rel (0) target = $region9
  $region8: #{_forward_impl.6} parent=0 // pred_region
    _
  $region9: #{_forward_impl.6} parent=0 // pred_fallthru
    _
  %v11 = vld [vmem:[%s1] sm:$0xff]
  %v12 = vld [vmem:[%s1 + $0x8] sm:$0xf]
  %v13 = vand.u32 %v11, 127
  %v14 = vand.u32 %v12, 127
  %v15 = vcvt.s32.f32 %v13
  %v16 = vcvt.s32.f32 %v14
  %v17 = vshra.s32 %v11, 7
  %v18 = vshra.s32 %v12, 7
  %v19 = vand.u32 %v17, 127
  %v20 = vand.u32 %v18, 127
  %v21 = vcvt.s32.f32 %v19
  %v22 = vcvt.s32.f32 %v20
  %v23 = vshra.s32 %v11, 14
  %v24 = vshra.s32 %v12, 14
  %vm25 = vcmp.eq.s32.totalorder %v23, 0
  %vm26 = vcmp.eq.s32.totalorder %v24, 0
  %vm27 = vcmp.eq.s32.totalorder %v23, 1
  %vm28 = vcmp.eq.s32.totalorder %v24, 1
  %v29 = vsel %vm27, 2.375, 5.0
  %v30 = vsel %vm28, 2.375, 5.0
  %v31 = vsel %vm25, 1.5, %v29
  %v32 = vsel %vm26, 1.5, %v30
  %v33 = vsel %vm27, 4.5, 3.5
  %v34 = vsel %vm28, 4.5, 3.5
  %v35 = vsel %vm25, 2.0, %v33
  %v36 = vsel %vm26, 2.0, %v34
  %v37 = vld [vmem:[%s0] ss:$8 sm:$0xf]
  %v38 = vld [vmem:[%s0] ss:$8 sm:$0xf0]
  %v39 = vor.u32 %v37, %v38
  %s40 = scalar_lea.vmem %s0, 64
  %v41 = vld [vmem:[%s40] ss:$8 sm:$0xf]
  %v42 = vxor.u32 %v39, 2147483648
  %v43 = vxor.u32 %v41, 2147483648
  %v44 = vmul.f32 %v42, 1.442695
  %v45 = vpow.pop %v44
  %v46 = vmul.f32 %v43, 1.442695
  %v47 = vpow.pop %v46
  %v48 = vadd.f32 %v45, 1.0
  %v49 = vadd.f32 %v47, 1.0
  %v50 = vrcp.pop %v48
  %v51 = vmul.f32 1.0, %v50
  %v52 = vrcp.pop %v49
  %v53 = vmul.f32 1.0, %v52
  %v54 = vadd.f32 %v51, %v15
  %v55 = vadd.f32 %v53, %v16
  %56 = vst [vmem:[%s2] ss:$4 sm:$0xff] %v54
  %v57 = vlaneseq
  %vm58 = vcmp.ge.s32.totalorder %v57, 0
  %vm59 = vcmp.lt.s32.totalorder %v57, 512
  %vm60 = vmand %vm58, %vm59
  %s61 = scalar_lea.vmem %s2, 32
  %62 = vst.msk [vmem:[%s61] ss:$4 sm:$0xf] %vm60, %v55
  %s63 = scalar_lea.vmem %s0, 1
  %v64 = vld [vmem:[%s63] ss:$8 sm:$0xf]
  %v65 = vld [vmem:[%s63] ss:$8 sm:$0xf0]
  %v66 = vor.u32 %v64, %v65
  %s67 = scalar_lea.vmem %s0, 65
  %v68 = vld [vmem:[%s67] ss:$8 sm:$0xf]
  %v69 = vxor.u32 %v66, 2147483648
  %v70 = vxor.u32 %v68, 2147483648
  %v71 = vmul.f32 %v69, 1.442695
  %v72 = vpow.pop %v71
  %v73 = vmul.f32 %v70, 1.442695
  %v74 = vpow.pop %v73
  %v75 = vadd.f32 %v72, 1.0
  %v76 = vadd.f32 %v74, 1.0
  %v77 = vrcp.pop %v75
  %v78 = vmul.f32 1.0, %v77
  %v79 = vrcp.pop %v76
  %v80 = vmul.f32 1.0, %v79
  %v81 = vadd.f32 %v78, %v21
  %v82 = vadd.f32 %v80, %v22
  %s83 = scalar_lea.vmem %s2, 1
  %84 = vst [vmem:[%s83] ss:$4 sm:$0xff] %v81
  %s85 = scalar_lea.vmem %s2, 33
  %86 = vst.msk [vmem:[%s85] ss:$4 sm:$0xf] %vm60, %v82
  %s87 = scalar_lea.vmem %s0, 2
  %v88 = vld [vmem:[%s87] ss:$8 sm:$0xf]
  %v89 = vld [vmem:[%s87] ss:$8 sm:$0xf0]
  %v90 = vor.u32 %v88, %v89
  %s91 = scalar_lea.vmem %s0, 66
  %v92 = vld [vmem:[%s91] ss:$8 sm:$0xf]
  %v93 = vmul.f32 %v90, 1.442695
  %v94 = vpow.pop %v93
  %v95 = vmul.f32 %v92, 1.442695
  %v96 = vpow.pop %v95
  %v97 = vmul.f32 %v94, %v31
  %v98 = vmul.f32 %v96, %v32
  %s99 = scalar_lea.vmem %s2, 2
  %100 = vst [vmem:[%s99] ss:$4 sm:$0xff] %v97
  %s101 = scalar_lea.vmem %s2, 34
  %102 = vst.msk [vmem:[%s101] ss:$4 sm:$0xf] %vm60, %v98
  %s103 = scalar_lea.vmem %s0, 3
  %v104 = vld [vmem:[%s103] ss:$8 sm:$0xf]
  %v105 = vld [vmem:[%s103] ss:$8 sm:$0xf0]
  %v106 = vor.u32 %v104, %v105
  %s107 = scalar_lea.vmem %s0, 67
  %v108 = vld [vmem:[%s107] ss:$8 sm:$0xf]
  %v109 = vmul.f32 %v106, 1.442695
  %v110 = vpow.pop %v109
  %v111 = vmul.f32 %v108, 1.442695
  %v112 = vpow.pop %v111
  %v113 = vmul.f32 %v110, %v35
  %v114 = vmul.f32 %v112, %v36
  %s115 = scalar_lea.vmem %s2, 3
  %116 = vst [vmem:[%s115] ss:$4 sm:$0xff] %v113
  %s117 = scalar_lea.vmem %s2, 35
  %118 = vst.msk [vmem:[%s117] ss:$4 sm:$0xf] %vm60, %v114
  // Predicated region
  $region10: #{_forward_impl.6} parent=0 // pred_check
    _
  $region11: #{_forward_impl.6} parent=0 // pred_check_branch
    %120 = sbr.rel (0) target = $region13
  $region12: #{_forward_impl.6} parent=0 // pred_region
    _
  $region13: #{_forward_impl.6} parent=0 // pred_fallthru
    _
  // Predicated region
  $region14: #{_forward_impl.6} parent=0 // pred_check
    _
  $region15: #{_forward_impl.6} parent=0 // pred_check_branch
    %122 = sbr.rel (0) target = $region17
  $region16: #{_forward_impl.6} parent=0 // pred_region
    _
  $region17: #{_forward_impl.6} parent=0 // pred_fallthru
    _

// kernel: _forward_impl.7
$region0: #{_forward_impl.7}
  #allocation0 [shape = 'u32[]', space=smem, size = 0x4, offset = 0x4, fixed_abs, tag = 'smem constant byte address 0x4 - core index']
  #allocation1 [shape = 'u32[144,128]{1,0:T(1,128)}', space=vmem, size = 0x12000, scoped, tag = 'internal scratch']
  #allocation2 [shape = 'f32[5]{0:T(128)}', space=smem, size = 0x200, scoped, tag = 'scratch operand']
  %s0 = inlined_call_operand.vmem [shape: f32[6,1536], index: 0, kind: input, shape index: {}]
  %s1 = inlined_call_operand.vmem [shape: f32[6,1536], index: 1, kind: input, shape index: {}]
  %s2 = inlined_call_operand.vmem [shape: f32[3,1536], index: 2, kind: input, shape index: {}]
  %s3 = inlined_call_operand.vmem [shape: f32[5], index: 3, kind: output, shape index: {}]
  %s4 = sld [smem:[#allocation0]]
  $region30: #{_forward_impl.7} parent=0
    _
  %s6 = ssub.s32 1, %s4
  %s7 = scalar_select 0, %s6, %s4
  $region1: #{_forward_impl.7} parent=0
    #allocation3 [shape = 'u8[512]{0}', space=smem, size = 0x200, scoped, tag = 'output window, operand 0, single buffered']
    #allocation4 [shape = 's32[1]{0}', space=sflag, size = 0x4, scoped, tag = 'scoped memory for _forward_impl.7']
    %8 = vsyncpa [#allocation4], 0
    // Predicated region
    $region2: #{_forward_impl.7} parent=1 // pred_check
      _
    $region3: #{_forward_impl.7} parent=1 // pred_check_branch
      %10 = sbr.rel (0) target = $region5
    $region4: #{_forward_impl.7} parent=1 // pred_region
      _
    $region5: #{_forward_impl.7} parent=1 // pred_fallthru
      _
    // Predicated region
    $region6: #{_forward_impl.7} parent=1 // pred_check
      _
    $region7: #{_forward_impl.7} parent=1 // pred_check_branch
      %12 = sbr.rel (0) target = $region9
    $region8: #{_forward_impl.7} parent=1 // pred_region
      _
    $region9: #{_forward_impl.7} parent=1 // pred_fallthru
      _
    // Predicated region
    $region10: #{_forward_impl.7} parent=1 // pred_check
      _
    $region11: #{_forward_impl.7} parent=1 // pred_check_branch
      %14 = sbr.rel (0) target = $region13
    $region12: #{_forward_impl.7} parent=1 // pred_region
      _
    $region13: #{_forward_impl.7} parent=1 // pred_fallthru
      _
    %p15 = scmp.eq.s32.totalorder 0, 0
    // Predicated region
    $region14: #{_forward_impl.7} parent=1 // pred_check
      %p16 = pneg %p15
    $region15: #{_forward_impl.7} parent=1 // pred_check_branch
      %18 = sbr.rel (%p16) target = $region17
    $region16: #{_forward_impl.7} parent=1 // pred_region
      %s19 = scalar_lea.smem [#allocation2], 0
      %20 = sst [smem:[%s19]] 0.0
      %s21 = scalar_lea.smem [#allocation2], 1
      %22 = sst [smem:[%s21]] 0.0
      %s23 = scalar_lea.smem [#allocation2], 2
      %24 = sst [smem:[%s23]] 0.0
      %s25 = scalar_lea.smem [#allocation2], 3
      %26 = sst [smem:[%s25]] 0.0
      %s27 = scalar_lea.smem [#allocation2], 4
      %28 = sst [smem:[%s27]] 0.0
    $region17: #{_forward_impl.7} parent=1 // pred_fallthru
      _
    %v29 = vld [vmem:[%s0] sm:$0x3f]
    %v30 = vld [vmem:[%s0 + $0x8] sm:$0x3f]
    %v31 = vld [vmem:[%s0 + $0x10] sm:$0x3f]
    %v32 = vld [vmem:[%s0 + $0x18] sm:$0x3f]
    %v33 = vld [vmem:[%s0 + $0x20] sm:$0x3f]
    %v34 = vld [vmem:[%s0 + $0x28] sm:$0x3f]
    %v35 = vld [vmem:[%s0 + $0x30] sm:$0x3f]
    %v36 = vld [vmem:[%s0 + $0x38] sm:$0x3f]
    %v37 = vld [vmem:[%s0 + $0x40] sm:$0x3f]
    %v38 = vld [vmem:[%s0 + $0x48] sm:$0x3f]
    %v39 = vld [vmem:[%s0 + $0x50] sm:$0x3f]
    %v40 = vld [vmem:[%s0 + $0x58] sm:$0x3f]
    %v41 = vld [vmem:[%s1] sm:$0x3f]
    %v42 = vld [vmem:[%s1 + $0x8] sm:$0x3f]
    %v43 = vld [vmem:[%s1 + $0x10] sm:$0x3f]
    %v44 = vld [vmem:[%s1 + $0x18] sm:$0x3f]
    %v45 = vld [vmem:[%s1 + $0x20] sm:$0x3f]
    %v46 = vld [vmem:[%s1 + $0x28] sm:$0x3f]
    %v47 = vld [vmem:[%s1 + $0x30] sm:$0x3f]
    %v48 = vld [vmem:[%s1 + $0x38] sm:$0x3f]
    %v49 = vld [vmem:[%s1 + $0x40] sm:$0x3f]
    %v50 = vld [vmem:[%s1 + $0x48] sm:$0x3f]
    %v51 = vld [vmem:[%s1 + $0x50] sm:$0x3f]
    %v52 = vld [vmem:[%s1 + $0x58] sm:$0x3f]
    %v53 = vld [vmem:[%s2] ss:$4 sm:$0xff]
    %s54 = scalar_lea.vmem %s2, 32
    %v55 = vld [vmem:[%s54] ss:$4 sm:$0xf]
    %s56 = scalar_lea.vmem %s2, 1
    %v57 = vld [vmem:[%s56] ss:$4 sm:$0xff]
    %s58 = scalar_lea.vmem %s2, 33
    %v59 = vld [vmem:[%s58] ss:$4 sm:$0xf]
    %s60 = scalar_lea.vmem %s2, 2
    %v61 = vld [vmem:[%s60] ss:$4 sm:$0xff]
    %s62 = scalar_lea.vmem %s2, 34
    %v63 = vld [vmem:[%s62] ss:$4 sm:$0xf]
    %v64 = vlaneseq
    %v65 = vshrl.u32 %v64, 7
    %vm66 = vcmp.eq.s32.totalorder %v65, 2
    %vm67 = vcmp.eq.s32.totalorder %v65, 3
    %vm68 = vmor %vm66, %vm67
    %v69 = vxor.u32 %v29, 2147483648
    %v70 = vxor.u32 %v30, 2147483648
    %v71 = vxor.u32 %v31, 2147483648
    %v72 = vxor.u32 %v32, 2147483648
    %v73 = vxor.u32 %v33, 2147483648
    %v74 = vxor.u32 %v34, 2147483648
    %v75 = vxor.u32 %v35, 2147483648
    %v76 = vxor.u32 %v36, 2147483648
    %v77 = vxor.u32 %v37, 2147483648
    %v78 = vxor.u32 %v38, 2147483648
    %v79 = vxor.u32 %v39, 2147483648
    %v80 = vxor.u32 %v40, 2147483648
    %v81 = vmul.f32 %v69, 1.442695
    %v82 = vpow.pop %v81
    %v83 = vmul.f32 %v70, 1.442695
    %v84 = vpow.pop %v83
    %v85 = vmul.f32 %v71, 1.442695
    %v86 = vpow.pop %v85
    %v87 = vmul.f32 %v72, 1.442695
    %v88 = vpow.pop %v87
    %v89 = vmul.f32 %v73, 1.442695
    %v90 = vpow.pop %v89
    %v91 = vmul.f32 %v74, 1.442695
    %v92 = vpow.pop %v91
    %v93 = vmul.f32 %v75, 1.442695
    %v94 = vpow.pop %v93
    %v95 = vmul.f32 %v76, 1.442695
    %v96 = vpow.pop %v95
    %v97 = vmul.f32 %v77, 1.442695
    %v98 = vpow.pop %v97
    %v99 = vmul.f32 %v78, 1.442695
    %v100 = vpow.pop %v99
    %v101 = vmul.f32 %v79, 1.442695
    %v102 = vpow.pop %v101
    %v103 = vmul.f32 %v80, 1.442695
    %v104 = vpow.pop %v103
    %v105 = vadd.f32 %v82, 1.0
    %v106 = vadd.f32 %v84, 1.0
    %v107 = vadd.f32 %v86, 1.0
    %v108 = vadd.f32 %v88, 1.0
    %v109 = vadd.f32 %v90, 1.0
    %v110 = vadd.f32 %v92, 1.0
    %v111 = vadd.f32 %v94, 1.0
    %v112 = vadd.f32 %v96, 1.0
    %v113 = vadd.f32 %v98, 1.0
    %v114 = vadd.f32 %v100, 1.0
    %v115 = vadd.f32 %v102, 1.0
    %v116 = vadd.f32 %v104, 1.0
    %v117 = vrcp.pop %v105
    %v118 = vmul.f32 1.0, %v117
    %v119 = vrcp.pop %v106
    %v120 = vmul.f32 1.0, %v119
    %v121 = vrcp.pop %v107
    %v122 = vmul.f32 1.0, %v121
    %v123 = vrcp.pop %v108
    %v124 = vmul.f32 1.0, %v123
    %v125 = vrcp.pop %v109
    %v126 = vmul.f32 1.0, %v125
    %v127 = vrcp.pop %v110
    %v128 = vmul.f32 1.0, %v127
    %v129 = vrcp.pop %v111
    %v130 = vmul.f32 1.0, %v129
    %v131 = vrcp.pop %v112
    %v132 = vmul.f32 1.0, %v131
    %v133 = vrcp.pop %v113
    %v134 = vmul.f32 1.0, %v133
    %v135 = vrcp.pop %v114
    %v136 = vmul.f32 1.0, %v135
    %v137 = vrcp.pop %v115
    %v138 = vmul.f32 1.0, %v137
    %v139 = vrcp.pop %v116
    %v140 = vmul.f32 1.0, %v139
    %v141 = vlog2.pop %v118
    %v142 = vmul.f32 %v141, 0.6931472
    %v143 = vlog2.pop %v120
    %v144 = vmul.f32 %v143, 0.6931472
    %v145 = vlog2.pop %v122
    %v146 = vmul.f32 %v145, 0.6931472
    %v147 = vlog2.pop %v124
    %v148 = vmul.f32 %v147, 0.6931472
    %v149 = vlog2.pop %v126
    %v150 = vmul.f32 %v149, 0.6931472
    %v151 = vlog2.pop %v128
    %v152 = vmul.f32 %v151, 0.6931472
    %v153 = vlog2.pop %v130
    %v154 = vmul.f32 %v153, 0.6931472
    %v155 = vlog2.pop %v132
    %v156 = vmul.f32 %v155, 0.6931472
    %v157 = vlog2.pop %v134
    %v158 = vmul.f32 %v157, 0.6931472
    %v159 = vlog2.pop %v136
    %v160 = vmul.f32 %v159, 0.6931472
    %v161 = vlog2.pop %v138
    %v162 = vmul.f32 %v161, 0.6931472
    %v163 = vlog2.pop %v140
    %v164 = vmul.f32 %v163, 0.6931472
    %v165 = vmax.f32 %v142, -100.0
    %v166 = vmax.f32 %v144, -100.0
    %v167 = vmax.f32 %v146, -100.0
    %v168 = vmax.f32 %v148, -100.0
    %v169 = vmax.f32 %v150, -100.0
    %v170 = vmax.f32 %v152, -100.0
    %v171 = vmax.f32 %v154, -100.0
    %v172 = vmax.f32 %v156, -100.0
    %v173 = vmax.f32 %v158, -100.0
    %v174 = vmax.f32 %v160, -100.0
    %v175 = vmax.f32 %v162, -100.0
    %v176 = vmax.f32 %v164, -100.0
    %v177 = vsub.f32 1.0, %v118
    %v178 = vsub.f32 1.0, %v120
    %v179 = vsub.f32 1.0, %v122
    %v180 = vsub.f32 1.0, %v124
    %v181 = vsub.f32 1.0, %v126
    %v182 = vsub.f32 1.0, %v128
    %v183 = vsub.f32 1.0, %v130
    %v184 = vsub.f32 1.0, %v132
    %v185 = vsub.f32 1.0, %v134
    %v186 = vsub.f32 1.0, %v136
    %v187 = vsub.f32 1.0, %v138
    %v188 = vsub.f32 1.0, %v140
    %v189 = vlog2.pop %v177
    %v190 = vmul.f32 %v189, 0.6931472
    %v191 = vlog2.pop %v178
    %v192 = vmul.f32 %v191, 0.6931472
    %v193 = vlog2.pop %v179
    %v194 = vmul.f32 %v193, 0.6931472
    %v195 = vlog2.pop %v180
    %v196 = vmul.f32 %v195, 0.6931472
    %v197 = vlog2.pop %v181
    %v198 = vmul.f32 %v197, 0.6931472
    %v199 = vlog2.pop %v182
    %v200 = vmul.f32 %v199, 0.6931472
    %v201 = vlog2.pop %v183
    %v202 = vmul.f32 %v201, 0.6931472
    %v203 = vlog2.pop %v184
    %v204 = vmul.f32 %v203, 0.6931472
    %v205 = vlog2.pop %v185
    %v206 = vmul.f32 %v205, 0.6931472
    %v207 = vlog2.pop %v186
    %v208 = vmul.f32 %v207, 0.6931472
    %v209 = vlog2.pop %v187
    %v210 = vmul.f32 %v209, 0.6931472
    %v211 = vlog2.pop %v188
    %v212 = vmul.f32 %v211, 0.6931472
    %v213 = vmax.f32 %v190, -100.0
    %v214 = vmax.f32 %v192, -100.0
    %v215 = vmax.f32 %v194, -100.0
    %v216 = vmax.f32 %v196, -100.0
    %v217 = vmax.f32 %v198, -100.0
    %v218 = vmax.f32 %v200, -100.0
    %v219 = vmax.f32 %v202, -100.0
    %v220 = vmax.f32 %v204, -100.0
    %v221 = vmax.f32 %v206, -100.0
    %v222 = vmax.f32 %v208, -100.0
    %v223 = vmax.f32 %v210, -100.0
    %v224 = vmax.f32 %v212, -100.0
    %v225 = vmul.f32 %v41, %v165
    %v226 = vmul.f32 %v42, %v166
    %v227 = vmul.f32 %v43, %v167
    %v228 = vmul.f32 %v44, %v168
    %v229 = vmul.f32 %v45, %v169
    %v230 = vmul.f32 %v46, %v170
    %v231 = vmul.f32 %v47, %v171
    %v232 = vmul.f32 %v48, %v172
    %v233 = vmul.f32 %v49, %v173
    %v234 = vmul.f32 %v50, %v174
    %v235 = vmul.f32 %v51, %v175
    %v236 = vmul.f32 %v52, %v176
    %v237 = vsub.f32 1.0, %v41
    %v238 = vsub.f32 1.0, %v42
    %v239 = vsub.f32 1.0, %v43
    %v240 = vsub.f32 1.0, %v44
    %v241 = vsub.f32 1.0, %v45
    %v242 = vsub.f32 1.0, %v46
    %v243 = vsub.f32 1.0, %v47
    %v244 = vsub.f32 1.0, %v48
    %v245 = vsub.f32 1.0, %v49
    %v246 = vsub.f32 1.0, %v50
    %v247 = vsub.f32 1.0, %v51
    %v248 = vsub.f32 1.0, %v52
    %v249 = vmul.f32 %v237, %v213
    %v250 = vmul.f32 %v238, %v214
    %v251 = vmul.f32 %v239, %v215
    %v252 = vmul.f32 %v240, %v216
    %v253 = vmul.f32 %v241, %v217
    %v254 = vmul.f32 %v242, %v218
    %v255 = vmul.f32 %v243, %v219
    %v256 = vmul.f32 %v244, %v220
    %v257 = vmul.f32 %v245, %v221
    %v258 = vmul.f32 %v246, %v222
    %v259 = vmul.f32 %v247, %v223
    %v260 = vmul.f32 %v248, %v224
    %v261 = vadd.f32 %v225, %v249
    %v262 = vadd.f32 %v226, %v250
    %v263 = vadd.f32 %v227, %v251
    %v264 = vadd.f32 %v228, %v252
    %v265 = vadd.f32 %v229, %v253
    %v266 = vadd.f32 %v230, %v254
    %v267 = vadd.f32 %v231, %v255
    %v268 = vadd.f32 %v232, %v256
    %v269 = vadd.f32 %v233, %v257
    %v270 = vadd.f32 %v234, %v258
    %v271 = vadd.f32 %v235, %v259
    %v272 = vadd.f32 %v236, %v260
    %v273 = vsub.f32 0.0, %v261
    %v274 = vsub.f32 0.0, %v262
    %v275 = vsub.f32 0.0, %v263
    %v276 = vsub.f32 0.0, %v264
    %v277 = vsub.f32 0.0, %v265
    %v278 = vsub.f32 0.0, %v266
    %v279 = vsub.f32 0.0, %v267
    %v280 = vsub.f32 0.0, %v268
    %v281 = vsub.f32 0.0, %v269
    %v282 = vsub.f32 0.0, %v270
    %v283 = vsub.f32 0.0, %v271
    %v284 = vsub.f32 0.0, %v272
    %v285 = vsub.f32 %v118, %v41
    %v286 = vsub.f32 %v120, %v42
    %v287 = vsub.f32 %v122, %v43
    %v288 = vsub.f32 %v124, %v44
    %v289 = vsub.f32 %v126, %v45
    %v290 = vsub.f32 %v128, %v46
    %v291 = vsub.f32 %v130, %v47
    %v292 = vsub.f32 %v132, %v48
    %v293 = vsub.f32 %v134, %v49
    %v294 = vsub.f32 %v136, %v50
    %v295 = vsub.f32 %v138, %v51
    %v296 = vsub.f32 %v140, %v52
    %v297 = vmul.f32 %v285, %v285
    %v298 = vmul.f32 %v286, %v286
    %v299 = vmul.f32 %v287, %v287
    %v300 = vmul.f32 %v288, %v288
    %v301 = vmul.f32 %v289, %v289
    %v302 = vmul.f32 %v290, %v290
    %v303 = vmul.f32 %v291, %v291
    %v304 = vmul.f32 %v292, %v292
    %v305 = vmul.f32 %v293, %v293
    %v306 = vmul.f32 %v294, %v294
    %v307 = vmul.f32 %v295, %v295
    %v308 = vmul.f32 %v296, %v296
    %v309 = vmul.f32 %v61, %v61
    %v310 = vmul.f32 %v63, %v63
    %v311 = vsub.f32 %v29, %v41
    %v312 = vsub.f32 %v30, %v42
    %v313 = vsub.f32 %v31, %v43
    %v314 = vsub.f32 %v32, %v44
    %v315 = vsub.f32 %v33, %v45
    %v316 = vsub.f32 %v34, %v46
    %v317 = vsub.f32 %v35, %v47
    %v318 = vsub.f32 %v36, %v48
    %v319 = vsub.f32 %v37, %v49
    %v320 = vsub.f32 %v38, %v50
    %v321 = vsub.f32 %v39, %v51
    %v322 = vsub.f32 %v40, %v52
    %v323 = vmul.f32 %v311, %v311
    %v324 = vmul.f32 %v312, %v312
    %v325 = vmul.f32 %v313, %v313
    %v326 = vmul.f32 %v314, %v314
    %v327 = vmul.f32 %v315, %v315
    %v328 = vmul.f32 %v316, %v316
    %v329 = vmul.f32 %v317, %v317
    %v330 = vmul.f32 %v318, %v318
    %v331 = vmul.f32 %v319, %v319
    %v332 = vmul.f32 %v320, %v320
    %v333 = vmul.f32 %v321, %v321
    %v334 = vmul.f32 %v322, %v322
    %v337 = vlaneseq
    %v338 = vshrl.u32 %v337, 7
    %v339 = vsub.s32 0, %v338
    %v340 = vrot.slane %v309, %v339
    %v341 = vlaneseq
    %v342 = vshrl.u32 %v341, 7
    %v343 = vsub.s32 1, %v342
    %v344 = vrot.slane %v309, %v343
    %v345 = vlaneseq
    %v346 = vshrl.u32 %v345, 7
    %v347 = vsub.s32 2, %v346
    %v348 = vrot.slane %v309, %v347
    %v349 = vlaneseq
    %v350 = vshrl.u32 %v349, 7
    %v351 = vsub.s32 3, %v350
    %v352 = vrot.slane %v309, %v351
    %v353 = vlaneseq
    %v354 = vshrl.u32 %v353, 7
    %v355 = vsub.s32 4, %v354
    %v356 = vrot.slane %v309, %v355
    %v357 = vlaneseq
    %v358 = vshrl.u32 %v357, 7
    %v359 = vsub.s32 5, %v358
    %v360 = vrot.slane %v309, %v359
    %v361 = vlaneseq
    %v362 = vshrl.u32 %v361, 7
    %v363 = vsub.s32 6, %v362
    %v364 = vrot.slane %v309, %v363
    %v365 = vlaneseq
    %v366 = vshrl.u32 %v365, 7
    %v367 = vsub.s32 7, %v366
    %v368 = vrot.slane %v309, %v367
    %v369 = vlaneseq
    %v370 = vshrl.u32 %v369, 7
    %v371 = vsub.s32 0, %v370
    %v372 = vrot.slane %v310, %v371
    %v373 = vlaneseq
    %v374 = vshrl.u32 %v373, 7
    %v375 = vsub.s32 1, %v374
    %v376 = vrot.slane %v310, %v375
    %v377 = vlaneseq
    %v378 = vshrl.u32 %v377, 7
    %v379 = vsub.s32 2, %v378
    %v380 = vrot.slane %v310, %v379
    %v381 = vlaneseq
    %v382 = vshrl.u32 %v381, 7
    %v383 = vsub.s32 3, %v382
    %v384 = vrot.slane %v310, %v383
    %v397 = vmul.f32 %v340, %v323
    %v398 = vmul.f32 %v344, %v324
    %v399 = vmul.f32 %v348, %v325
    %v400 = vmul.f32 %v352, %v326
    %v401 = vmul.f32 %v356, %v327
    %v402 = vmul.f32 %v360, %v328
    %v403 = vmul.f32 %v364, %v329
    %v404 = vmul.f32 %v368, %v330
    %v405 = vmul.f32 %v372, %v331
    %v406 = vmul.f32 %v376, %v332
    %v407 = vmul.f32 %v380, %v333
    %v408 = vmul.f32 %v384, %v334
    %vm409 = vcmp.eq.s32.totalorder %v65, 4
    %v412 = vlaneseq
    %v413 = vshrl.u32 %v412, 7
    %v414 = vsub.s32 0, %v413
    %v415 = vrot.slane %v53, %v414
    %v416 = vlaneseq
    %v417 = vshrl.u32 %v416, 7
    %v418 = vsub.s32 1, %v417
    %v419 = vrot.slane %v53, %v418
    %v420 = vlaneseq
    %v421 = vshrl.u32 %v420, 7
    %v422 = vsub.s32 2, %v421
    %v423 = vrot.slane %v53, %v422
    %v424 = vlaneseq
    %v425 = vshrl.u32 %v424, 7
    %v426 = vsub.s32 3, %v425
    %v427 = vrot.slane %v53, %v426
    %v428 = vlaneseq
    %v429 = vshrl.u32 %v428, 7
    %v430 = vsub.s32 4, %v429
    %v431 = vrot.slane %v53, %v430
    %v432 = vlaneseq
    %v433 = vshrl.u32 %v432, 7
    %v434 = vsub.s32 5, %v433
    %v435 = vrot.slane %v53, %v434
    %v436 = vlaneseq
    %v437 = vshrl.u32 %v436, 7
    %v438 = vsub.s32 6, %v437
    %v439 = vrot.slane %v53, %v438
    %v440 = vlaneseq
    %v441 = vshrl.u32 %v440, 7
    %v442 = vsub.s32 7, %v441
    %v443 = vrot.slane %v53, %v442
    %v444 = vlaneseq
    %v445 = vshrl.u32 %v444, 7
    %v446 = vsub.s32 0, %v445
    %v447 = vrot.slane %v55, %v446
    %v448 = vlaneseq
    %v449 = vshrl.u32 %v448, 7
    %v450 = vsub.s32 1, %v449
    %v451 = vrot.slane %v55, %v450
    %v452 = vlaneseq
    %v453 = vshrl.u32 %v452, 7
    %v454 = vsub.s32 2, %v453
    %v455 = vrot.slane %v55, %v454
    %v456 = vlaneseq
    %v457 = vshrl.u32 %v456, 7
    %v458 = vsub.s32 3, %v457
    %v459 = vrot.slane %v55, %v458
    %v474 = vlaneseq
    %v475 = vshrl.u32 %v474, 7
    %v476 = vsub.s32 0, %v475
    %v477 = vrot.slane %v57, %v476
    %v478 = vlaneseq
    %v479 = vshrl.u32 %v478, 7
    %v480 = vsub.s32 1, %v479
    %v481 = vrot.slane %v57, %v480
    %v482 = vlaneseq
    %v483 = vshrl.u32 %v482, 7
    %v484 = vsub.s32 2, %v483
    %v485 = vrot.slane %v57, %v484
    %v486 = vlaneseq
    %v487 = vshrl.u32 %v486, 7
    %v488 = vsub.s32 3, %v487
    %v489 = vrot.slane %v57, %v488
    %v490 = vlaneseq
    %v491 = vshrl.u32 %v490, 7
    %v492 = vsub.s32 4, %v491
    %v493 = vrot.slane %v57, %v492
    %v494 = vlaneseq
    %v495 = vshrl.u32 %v494, 7
    %v496 = vsub.s32 5, %v495
    %v497 = vrot.slane %v57, %v496
    %v498 = vlaneseq
    %v499 = vshrl.u32 %v498, 7
    %v500 = vsub.s32 6, %v499
    %v501 = vrot.slane %v57, %v500
    %v502 = vlaneseq
    %v503 = vshrl.u32 %v502, 7
    %v504 = vsub.s32 7, %v503
    %v505 = vrot.slane %v57, %v504
    %v506 = vlaneseq
    %v507 = vshrl.u32 %v506, 7
    %v508 = vsub.s32 0, %v507
    %v509 = vrot.slane %v59, %v508
    %v510 = vlaneseq
    %v511 = vshrl.u32 %v510, 7
    %v512 = vsub.s32 1, %v511
    %v513 = vrot.slane %v59, %v512
    %v514 = vlaneseq
    %v515 = vshrl.u32 %v514, 7
    %v516 = vsub.s32 2, %v515
    %v517 = vrot.slane %v59, %v516
    %v518 = vlaneseq
    %v519 = vshrl.u32 %v518, 7
    %v520 = vsub.s32 3, %v519
    %v521 = vrot.slane %v59, %v520
    %v534 = vsel %vm409, %v415, %v477
    %v535 = vsel %vm409, %v419, %v481
    %v536 = vsel %vm409, %v423, %v485
    %v537 = vsel %vm409, %v427, %v489
    %v538 = vsel %vm409, %v431, %v493
    %v539 = vsel %vm409, %v435, %v497
    %v540 = vsel %vm409, %v439, %v501
    %v541 = vsel %vm409, %v443, %v505
    %v542 = vsel %vm409, %v447, %v509
    %v543 = vsel %vm409, %v451, %v513
    %v544 = vsel %vm409, %v455, %v517
    %v545 = vsel %vm409, %v459, %v521
    %vm546 = vcmp.lt.s32.totalorder %v65, 2
    %v547 = vmul.f32 %v57, %v309
    %v548 = vmul.f32 %v59, %v310
    %v551 = vlaneseq
    %v552 = vshrl.u32 %v551, 7
    %v553 = vsub.s32 0, %v552
    %v554 = vrot.slane %v547, %v553
    %v555 = vlaneseq
    %v556 = vshrl.u32 %v555, 7
    %v557 = vsub.s32 1, %v556
    %v558 = vrot.slane %v547, %v557
    %v559 = vlaneseq
    %v560 = vshrl.u32 %v559, 7
    %v561 = vsub.s32 2, %v560
    %v562 = vrot.slane %v547, %v561
    %v563 = vlaneseq
    %v564 = vshrl.u32 %v563, 7
    %v565 = vsub.s32 3, %v564
    %v566 = vrot.slane %v547, %v565
    %v567 = vlaneseq
    %v568 = vshrl.u32 %v567, 7
    %v569 = vsub.s32 4, %v568
    %v570 = vrot.slane %v547, %v569
    %v571 = vlaneseq
    %v572 = vshrl.u32 %v571, 7
    %v573 = vsub.s32 5, %v572
    %v574 = vrot.slane %v547, %v573
    %v575 = vlaneseq
    %v576 = vshrl.u32 %v575, 7
    %v577 = vsub.s32 6, %v576
    %v578 = vrot.slane %v547, %v577
    %v579 = vlaneseq
    %v580 = vshrl.u32 %v579, 7
    %v581 = vsub.s32 7, %v580
    %v582 = vrot.slane %v547, %v581
    %v583 = vlaneseq
    %v584 = vshrl.u32 %v583, 7
    %v585 = vsub.s32 0, %v584
    %v586 = vrot.slane %v548, %v585
    %v587 = vlaneseq
    %v588 = vshrl.u32 %v587, 7
    %v589 = vsub.s32 1, %v588
    %v590 = vrot.slane %v548, %v589
    %v591 = vlaneseq
    %v592 = vshrl.u32 %v591, 7
    %v593 = vsub.s32 2, %v592
    %v594 = vrot.slane %v548, %v593
    %v595 = vlaneseq
    %v596 = vshrl.u32 %v595, 7
    %v597 = vsub.s32 3, %v596
    %v598 = vrot.slane %v548, %v597
    %v611 = vmul.f32 %v554, %v273
    %v612 = vmul.f32 %v558, %v274
    %v613 = vmul.f32 %v562, %v275
    %v614 = vmul.f32 %v566, %v276
    %v615 = vmul.f32 %v570, %v277
    %v616 = vmul.f32 %v574, %v278
    %v617 = vmul.f32 %v578, %v279
    %v618 = vmul.f32 %v582, %v280
    %v619 = vmul.f32 %v586, %v281
    %v620 = vmul.f32 %v590, %v282
    %v621 = vmul.f32 %v594, %v283
    %v622 = vmul.f32 %v598, %v284
    %v623 = vsel %vm546, %v611, 0.0
    %v624 = vsel %vm546, %v612, 0.0
    %v625 = vsel %vm546, %v613, 0.0
    %v626 = vsel %vm546, %v614, 0.0
    %v627 = vsel %vm546, %v615, 0.0
    %v628 = vsel %vm546, %v616, 0.0
    %v629 = vsel %vm546, %v617, 0.0
    %v630 = vsel %vm546, %v618, 0.0
    %v631 = vsel %vm546, %v619, 0.0
    %v632 = vsel %vm546, %v620, 0.0
    %v633 = vsel %vm546, %v621, 0.0
    %v634 = vsel %vm546, %v622, 0.0
    %v635 = vmul.f32 %v477, %v397
    %v636 = vmul.f32 %v481, %v398
    %v637 = vmul.f32 %v485, %v399
    %v638 = vmul.f32 %v489, %v400
    %v639 = vmul.f32 %v493, %v401
    %v640 = vmul.f32 %v497, %v402
    %v641 = vmul.f32 %v501, %v403
    %v642 = vmul.f32 %v505, %v404
    %v643 = vmul.f32 %v509, %v405
    %v644 = vmul.f32 %v513, %v406
    %v645 = vmul.f32 %v517, %v407
    %v646 = vmul.f32 %v521, %v408
    %v647 = vsel %vm68, %v635, 0.0
    %v648 = vsel %vm68, %v636, 0.0
    %v649 = vsel %vm68, %v637, 0.0
    %v650 = vsel %vm68, %v638, 0.0
    %v651 = vsel %vm68, %v639, 0.0
    %v652 = vsel %vm68, %v640, 0.0
    %v653 = vsel %vm68, %v641, 0.0
    %v654 = vsel %vm68, %v642, 0.0
    %v655 = vsel %vm68, %v643, 0.0
    %v656 = vsel %vm68, %v644, 0.0
    %v657 = vsel %vm68, %v645, 0.0
    %v658 = vsel %vm68, %v646, 0.0
    %v659 = vmul.f32 %v415, %v273
    %v660 = vmul.f32 %v419, %v274
    %v661 = vmul.f32 %v423, %v275
    %v662 = vmul.f32 %v427, %v276
    %v663 = vmul.f32 %v431, %v277
    %v664 = vmul.f32 %v435, %v278
    %v665 = vmul.f32 %v439, %v279
    %v666 = vmul.f32 %v443, %v280
    %v667 = vmul.f32 %v447, %v281
    %v668 = vmul.f32 %v451, %v282
    %v669 = vmul.f32 %v455, %v283
    %v670 = vmul.f32 %v459, %v284
    %v671 = vsel %vm409, %v659, 0.0
    %v672 = vsel %vm409, %v660, 0.0
    %v673 = vsel %vm409, %v661, 0.0
    %v674 = vsel %vm409, %v662, 0.0
    %v675 = vsel %vm409, %v663, 0.0
    %v676 = vsel %vm409, %v664, 0.0
    %v677 = vsel %vm409, %v665, 0.0
    %v678 = vsel %vm409, %v666, 0.0
    %v679 = vsel %vm409, %v667, 0.0
    %v680 = vsel %vm409, %v668, 0.0
    %v681 = vsel %vm409, %v669, 0.0
    %v682 = vsel %vm409, %v670, 0.0
    %vm683 = vcmp.ge.s32.totalorder %v65, 5
    %v684 = vmul.f32 %v477, %v273
    %v685 = vmul.f32 %v481, %v274
    %v686 = vmul.f32 %v485, %v275
    %v687 = vmul.f32 %v489, %v276
    %v688 = vmul.f32 %v493, %v277
    %v689 = vmul.f32 %v497, %v278
    %v690 = vmul.f32 %v501, %v279
    %v691 = vmul.f32 %v505, %v280
    %v692 = vmul.f32 %v509, %v281
    %v693 = vmul.f32 %v513, %v282
    %v694 = vmul.f32 %v517, %v283
    %v695 = vmul.f32 %v521, %v284
    %v696 = vsel %vm683, %v684, 0.0
    %v697 = vsel %vm683, %v685, 0.0
    %v698 = vsel %vm683, %v686, 0.0
    %v699 = vsel %vm683, %v687, 0.0
    %v700 = vsel %vm683, %v688, 0.0
    %v701 = vsel %vm683, %v689, 0.0
    %v702 = vsel %vm683, %v690, 0.0
    %v703 = vsel %vm683, %v691, 0.0
    %v704 = vsel %vm683, %v692, 0.0
    %v705 = vsel %vm683, %v693, 0.0
    %v706 = vsel %vm683, %v694, 0.0
    %v707 = vsel %vm683, %v695, 0.0
    %v708 = vmul.f32 %v534, %v297
    %v709 = vmul.f32 %v535, %v298
    %v710 = vmul.f32 %v536, %v299
    %v711 = vmul.f32 %v537, %v300
    %v712 = vmul.f32 %v538, %v301
    %v713 = vmul.f32 %v539, %v302
    %v714 = vmul.f32 %v540, %v303
    %v715 = vmul.f32 %v541, %v304
    %v716 = vmul.f32 %v542, %v305
    %v717 = vmul.f32 %v543, %v306
    %v718 = vmul.f32 %v544, %v307
    %v719 = vmul.f32 %v545, %v308
    %v720 = vsel %vm68, %v635, %v708
    %v721 = vsel %vm68, %v636, %v709
    %v722 = vsel %vm68, %v637, %v710
    %v723 = vsel %vm68, %v638, %v711
    %v724 = vsel %vm68, %v639, %v712
    %v725 = vsel %vm68, %v640, %v713
    %v726 = vsel %vm68, %v641, %v714
    %v727 = vsel %vm68, %v642, %v715
    %v728 = vsel %vm68, %v643, %v716
    %v729 = vsel %vm68, %v644, %v717
    %v730 = vsel %vm68, %v645, %v718
    %v731 = vsel %vm68, %v646, %v719
    %s732 = sld [smem:[#allocation2]]
    %vm733 = vcmask 1045504
    %v734 = vsel %vm733, %v623, 0.0
    %v735 = vsel %vm733, %v624, 0.0
    %v736 = vadd.f32 %v734, %v735
    %v737 = vsel %vm733, %v625, 0.0
    %v738 = vadd.f32 %v736, %v737
    %v739 = vsel %vm733, %v626, 0.0
    %v740 = vadd.f32 %v738, %v739
    %v741 = vsel %vm733, %v627, 0.0
    %v742 = vadd.f32 %v740, %v741
    %v743 = vsel %vm733, %v628, 0.0
    %v744 = vadd.f32 %v742, %v743
    %v745 = vsel %vm733, %v629, 0.0
    %v746 = vadd.f32 %v744, %v745
    %v747 = vsel %vm733, %v630, 0.0
    %v748 = vadd.f32 %v746, %v747
    %v749 = vsel %vm733, %v631, 0.0
    %v750 = vadd.f32 %v748, %v749
    %v751 = vsel %vm733, %v632, 0.0
    %v752 = vadd.f32 %v750, %v751
    %v753 = vsel %vm733, %v633, 0.0
    %v754 = vadd.f32 %v752, %v753
    %v755 = vsel %vm733, %v634, 0.0
    %v756 = vadd.f32 %v754, %v755
    %757 = vadd.xlane.f32.xlu0 %v756
    %v758 = vpop.xlane.xlu0 %757
    %v759 = vrot.slane %v758, 4
    %v760 = vadd.f32 %v758, %v759
    %v761 = vrot.slane %v760, 2
    %v762 = vadd.f32 %v760, %v761
    %v763 = vrot.slane %v762, 1
    %v764 = vadd.f32 %v762, %v763
    %s765 = vtos %v764
    %s766 = sadd.f32 %s732, %s765
    %s767 = scalar_lea.smem [#allocation2], 0
    %768 = sst [smem:[%s767]] %s766
    %s769 = sld [smem:[#allocation2 + $0x1]]
    %v770 = vsel %vm733, %v647, 0.0
    %v771 = vsel %vm733, %v648, 0.0
    %v772 = vadd.f32 %v770, %v771
    %v773 = vsel %vm733, %v649, 0.0
    %v774 = vadd.f32 %v772, %v773
    %v775 = vsel %vm733, %v650, 0.0
    %v776 = vadd.f32 %v774, %v775
    %v777 = vsel %vm733, %v651, 0.0
    %v778 = vadd.f32 %v776, %v777
    %v779 = vsel %vm733, %v652, 0.0
    %v780 = vadd.f32 %v778, %v779
    %v781 = vsel %vm733, %v653, 0.0
    %v782 = vadd.f32 %v780, %v781
    %v783 = vsel %vm733, %v654, 0.0
    %v784 = vadd.f32 %v782, %v783
    %v785 = vsel %vm733, %v655, 0.0
    %v786 = vadd.f32 %v784, %v785
    %v787 = vsel %vm733, %v656, 0.0
    %v788 = vadd.f32 %v786, %v787
    %v789 = vsel %vm733, %v657, 0.0
    %v790 = vadd.f32 %v788, %v789
    %v791 = vsel %vm733, %v658, 0.0
    %v792 = vadd.f32 %v790, %v791
    %793 = vadd.xlane.f32.xlu0 %v792
    %v794 = vpop.xlane.xlu0 %793
    %v795 = vrot.slane %v794, 4
    %v796 = vadd.f32 %v794, %v795
    %v797 = vrot.slane %v796, 2
    %v798 = vadd.f32 %v796, %v797
    %v799 = vrot.slane %v798, 1
    %v800 = vadd.f32 %v798, %v799
    %s801 = vtos %v800
    %s802 = smul.f32 %s801, 0.5
    %s803 = sadd.f32 %s769, %s802
    %s804 = scalar_lea.smem [#allocation2], 1
    %805 = sst [smem:[%s804]] %s803
    %s806 = sld [smem:[#allocation2 + $0x2]]
    %v807 = vsel %vm733, %v671, 0.0
    %v808 = vsel %vm733, %v672, 0.0
    %v809 = vadd.f32 %v807, %v808
    %v810 = vsel %vm733, %v673, 0.0
    %v811 = vadd.f32 %v809, %v810
    %v812 = vsel %vm733, %v674, 0.0
    %v813 = vadd.f32 %v811, %v812
    %v814 = vsel %vm733, %v675, 0.0
    %v815 = vadd.f32 %v813, %v814
    %v816 = vsel %vm733, %v676, 0.0
    %v817 = vadd.f32 %v815, %v816
    %v818 = vsel %vm733, %v677, 0.0
    %v819 = vadd.f32 %v817, %v818
    %v820 = vsel %vm733, %v678, 0.0
    %v821 = vadd.f32 %v819, %v820
    %v822 = vsel %vm733, %v679, 0.0
    %v823 = vadd.f32 %v821, %v822
    %v824 = vsel %vm733, %v680, 0.0
    %v825 = vadd.f32 %v823, %v824
    %v826 = vsel %vm733, %v681, 0.0
    %v827 = vadd.f32 %v825, %v826
    %v828 = vsel %vm733, %v682, 0.0
    %v829 = vadd.f32 %v827, %v828
    %830 = vadd.xlane.f32.xlu0 %v829
    %v831 = vpop.xlane.xlu0 %830
    %v832 = vrot.slane %v831, 4
    %v833 = vadd.f32 %v831, %v832
    %v834 = vrot.slane %v833, 2
    %v835 = vadd.f32 %v833, %v834
    %v836 = vrot.slane %v835, 1
    %v837 = vadd.f32 %v835, %v836
    %s838 = vtos %v837
    %s839 = sadd.f32 %s806, %s838
    %s840 = scalar_lea.smem [#allocation2], 2
    %841 = sst [smem:[%s840]] %s839
    %s842 = sld [smem:[#allocation2 + $0x3]]
    %v843 = vsel %vm733, %v696, 0.0
    %v844 = vsel %vm733, %v697, 0.0
    %v845 = vadd.f32 %v843, %v844
    %v846 = vsel %vm733, %v698, 0.0
    %v847 = vadd.f32 %v845, %v846
    %v848 = vsel %vm733, %v699, 0.0
    %v849 = vadd.f32 %v847, %v848
    %v850 = vsel %vm733, %v700, 0.0
    %v851 = vadd.f32 %v849, %v850
    %v852 = vsel %vm733, %v701, 0.0
    %v853 = vadd.f32 %v851, %v852
    %v854 = vsel %vm733, %v702, 0.0
    %v855 = vadd.f32 %v853, %v854
    %v856 = vsel %vm733, %v703, 0.0
    %v857 = vadd.f32 %v855, %v856
    %v858 = vsel %vm733, %v704, 0.0
    %v859 = vadd.f32 %v857, %v858
    %v860 = vsel %vm733, %v705, 0.0
    %v861 = vadd.f32 %v859, %v860
    %v862 = vsel %vm733, %v706, 0.0
    %v863 = vadd.f32 %v861, %v862
    %v864 = vsel %vm733, %v707, 0.0
    %v865 = vadd.f32 %v863, %v864
    %866 = vadd.xlane.f32.xlu0 %v865
    %v867 = vpop.xlane.xlu0 %866
    %v868 = vrot.slane %v867, 4
    %v869 = vadd.f32 %v867, %v868
    %v870 = vrot.slane %v869, 2
    %v871 = vadd.f32 %v869, %v870
    %v872 = vrot.slane %v871, 1
    %v873 = vadd.f32 %v871, %v872
    %s874 = vtos %v873
    %s875 = sadd.f32 %s842, %s874
    %s876 = scalar_lea.smem [#allocation2], 3
    %877 = sst [smem:[%s876]] %s875
    %s878 = sld [smem:[#allocation2 + $0x4]]
    %v879 = vsel %vm733, %v720, 0.0
    %v880 = vsel %vm733, %v721, 0.0
    %v881 = vadd.f32 %v879, %v880
    %v882 = vsel %vm733, %v722, 0.0
    %v883 = vadd.f32 %v881, %v882
    %v884 = vsel %vm733, %v723, 0.0
    %v885 = vadd.f32 %v883, %v884
    %v886 = vsel %vm733, %v724, 0.0
    %v887 = vadd.f32 %v885, %v886
    %v888 = vsel %vm733, %v725, 0.0
    %v889 = vadd.f32 %v887, %v888
    %v890 = vsel %vm733, %v726, 0.0
    %v891 = vadd.f32 %v889, %v890
    %v892 = vsel %vm733, %v727, 0.0
    %v893 = vadd.f32 %v891, %v892
    %v894 = vsel %vm733, %v728, 0.0
    %v895 = vadd.f32 %v893, %v894
    %v896 = vsel %vm733, %v729, 0.0
    %v897 = vadd.f32 %v895, %v896
    %v898 = vsel %vm733, %v730, 0.0
    %v899 = vadd.f32 %v897, %v898
    %v900 = vsel %vm733, %v731, 0.0
    %v901 = vadd.f32 %v899, %v900
    %902 = vadd.xlane.f32.xlu0 %v901
    %v903 = vpop.xlane.xlu0 %902
    %v904 = vrot.slane %v903, 4
    %v905 = vadd.f32 %v903, %v904
    %v906 = vrot.slane %v905, 2
    %v907 = vadd.f32 %v905, %v906
    %v908 = vrot.slane %v907, 1
    %v909 = vadd.f32 %v907, %v908
    %s910 = vtos %v909
    %s911 = sadd.f32 %s878, %s910
    %s912 = scalar_lea.smem [#allocation2], 4
    %913 = sst [smem:[%s912]] %s911
    // Predicated region
    $region18: #{_forward_impl.7} parent=1 // pred_check
      %p914 = pneg %p15
    $region19: #{_forward_impl.7} parent=1 // pred_check_branch
      %916 = sbr.rel (%p914) target = $region21
    $region20: #{_forward_impl.7} parent=1 // pred_region
      %s917 = sld [smem:[#allocation2]]
      %s918 = scalar_lea.smem [#allocation3], 0
      %919 = sst [smem:[%s918]] %s917
      %s920 = sld [smem:[#allocation2 + $0x1]]
      %s921 = scalar_lea.smem [#allocation3], 1
      %922 = sst [smem:[%s921]] %s920
      %s923 = sld [smem:[#allocation2 + $0x2]]
      %s924 = scalar_lea.smem [#allocation3], 2
      %925 = sst [smem:[%s924]] %s923
      %s926 = sld [smem:[#allocation2 + $0x3]]
      %s927 = scalar_lea.smem [#allocation3], 3
      %928 = sst [smem:[%s927]] %s926
      %s929 = sld [smem:[#allocation2 + $0x4]]
      %s930 = scalar_lea.smem [#allocation3], 4
      %931 = sst [smem:[%s930]] %s929
    $region21: #{_forward_impl.7} parent=1 // pred_fallthru
      _
    // Predicated region
    $region22: #{_forward_impl.7} parent=1 // pred_check
      _
    $region23: #{_forward_impl.7} parent=1 // pred_check_branch
      %933 = sbr.rel (0) target = $region25
    $region24: #{_forward_impl.7} parent=1 // pred_region
      %s935 = ssub.s32 16, 16
      %936 = vsyncadd [#allocation4], %s935
      %s938 = sshll.u32 %s3, 4
      %s939 = int_to_ptr.vmem [resolvable:$true] %s938
      %941 = dma.smem_to_vmem [#allocation3], 16, %s939, [#allocation4]
    $region25: #{_forward_impl.7} parent=1 // pred_fallthru
      _
    // Predicated region
    $region26: #{_forward_impl.7} parent=1 // pred_check
      _
    $region27: #{_forward_impl.7} parent=1 // pred_check_branch
      %943 = sbr.rel (0) target = $region29
    $region28: #{_forward_impl.7} parent=1 // pred_region
      %944 = dma.done [#allocation4], 16
    $region29: #{_forward_impl.7} parent=1 // pred_fallthru
      _
    %945 = sfence
    %946 = vsyncpa [#allocation4], 1

</llo_original>
